<compile_context>
chip_gen: v5e
topology: v5e:2x2
jax: 0.10.0
libtpu: 0.0.40
codegen_flags: <defaults>
</compile_context>

<pallas_src>
import functools

import jax
import jax.numpy as jnp
from jax.experimental import pallas as pl
from jax.experimental.pallas import tpu as pltpu

# ---- model hyper-parameters (small, consistent with (B, num_patches, d_model)) ----
B = 2
N_PATCH = 8
D_MODEL = 32
N_HEADS = 4
D_HEAD = D_MODEL // N_HEADS
D_FF = 64
NUM_LAYERS = 2
EPS = 1e-5

# MXU operand dtype (f32 accumulation everywhere).  bf16 is the right choice on
# v5e/v6e/v7x; use jnp.float32 for exact-f32 parity with the PyTorch reference.
MXU_DTYPE = jnp.bfloat16


def _layernorm(x, gamma, beta):
    mu = jnp.mean(x, axis=-1, keepdims=True)
    var = jnp.mean((x - mu) ** 2, axis=-1, keepdims=True)
    return (x - mu) * jax.lax.rsqrt(var + EPS) * gamma + beta


# ------------------------- fused Pallas kernel -------------------------

def encoder_kernel(x_ref, mask_ref,
                   w_qkv_ref, b_qkv_ref, w_o_ref, w1_ref, b1_ref, w2_ref,
                   ln_ref, b_out_ref, fn_ref,
                   out_ref,
                   *, num_layers, n_patch, n_heads, apply_final_norm):
    rows, d_model = x_ref.shape
    d_head = d_model // n_heads
    scale = 1.0 / (d_head ** 0.5)

    attn_mask = mask_ref[...]                      # (B*N, B*N): 0 same batch, -1e30 cross
    x = x_ref[...].astype(jnp.float32)             # (B*N, D), resident in vregs/VMEM

    for l in range(num_layers):                    # static unroll (tiny layer count)
        ln_l = ln_ref[l]                           # (4, D): ln1_g, ln1_b, ln2_g, ln2_b
        b_out_l = b_out_ref[l]                     # (2, D): attn-out bias, mlp-out bias

        # ---------------- multi-head self-attention (pre-LN) ----------------
        xn = _layernorm(x, ln_l[0:1, :], ln_l[1:2, :])
        # single fused QKV projection on the whole (B*N, D) slab
        qkv = jnp.dot(xn.astype(MXU_DTYPE), w_qkv_ref[l],
                      preferred_element_type=jnp.float32) + b_qkv_ref[l]   # (B*N, 3D) f32

        heads = []
        for h in range(n_heads):                   # static unroll over heads (H tiny)
            q_h = qkv[:, h * d_head:(h + 1) * d_head]
            k_h = qkv[:, d_model + h * d_head:d_model + (h + 1) * d_head]
            v_h = qkv[:, 2 * d_model + h * d_head:2 * d_model + (h + 1) * d_head]

            # scores over the whole (B*N) row axis; cross-batch entries masked out
            s = jax.lax.dot_general(
                q_h.astype(MXU_DTYPE), k_h.astype(MXU_DTYPE),
                (((1,), (1,)), ((), ())),
                preferred_element_type=jnp.float32) * scale + attn_mask     # (B*N, B*N)
            s = s - jnp.max(s, axis=-1, keepdims=True)
            p = jnp.exp(s)
            p = p / jnp.sum(p, axis=-1, keepdims=True)        # exact softmax (parity)

            heads.append(jnp.dot(p.astype(MXU_DTYPE), v_h.astype(MXU_DTYPE),
                                 preferred_element_type=jnp.float32))       # (B*N, Dh)

        ctx = jnp.concatenate(heads, axis=-1)                 # head concat -> (B*N, D)
        attn = jnp.dot(ctx.astype(MXU_DTYPE), w_o_ref[l],
                       preferred_element_type=jnp.float32) + b_out_l[0:1, :]
        x = x + attn                                          # residual

        # ---------------- MLP block (pre-LN) ----------------
        xn2 = _layernorm(x, ln_l[2:3, :], ln_l[3:4, :])
        h1 = jnp.dot(xn2.astype(MXU_DTYPE), w1_ref[l],
                     preferred_element_type=jnp.float32) + b1_ref[l]
        h1 = jax.nn.gelu(h1, approximate=True)                # tanh-GELU (EUP-friendly)
        mlp = jnp.dot(h1.astype(MXU_DTYPE), w2_ref[l],
                      preferred_element_type=jnp.float32) + b_out_l[1:2, :]
        x = x + mlp                                           # residual

    if apply_final_norm:
        x = _layernorm(x, fn_ref[0:1, :], fn_ref[1:2, :])
    out_ref[...] = x.astype(out_ref.dtype)


# ------------------------- wrapper -------------------------

def _pack_params(layer_params, norm_params, d_model, d_ff):
    """Stack per-layer params along a leading layer axis and pack them into a small
    number of tensors (weights pre-cast to the MXU operand dtype)."""
    def st(name):
        return jnp.stack([jnp.asarray(lp[name], jnp.float32) for lp in layer_params], 0)

    L = len(layer_params)
    w_qkv = jnp.concatenate([st("wq"), st("wk"), st("wv")], axis=-1)        # (L, D, 3D)
    b_qkv = jnp.concatenate([st("bq"), st("bk"), st("bv")], axis=-1)        # (L, 3D)
    ln = jnp.stack([st("ln1_g"), st("ln1_b"), st("ln2_g"), st("ln2_b")], 1)  # (L, 4, D)
    b_out = jnp.stack([st("bo"), st("b2")], axis=1)                          # (L, 2, D)

    if norm_params is not None:
        fn = jnp.stack([jnp.asarray(norm_params["g"], jnp.float32),
                        jnp.asarray(norm_params["b"], jnp.float32)], axis=0)  # (2, D)
    else:  # dummies; statically skipped in the kernel
        fn = jnp.stack([jnp.ones((d_model,), jnp.float32),
                        jnp.zeros((d_model,), jnp.float32)], axis=0)

    return [
        w_qkv.astype(MXU_DTYPE),
        b_qkv.reshape(L, 1, 3 * d_model),
        st("wo").astype(MXU_DTYPE),              # (L, D, D)
        st("w1").astype(MXU_DTYPE),              # (L, D, F)
        st("b1").reshape(L, 1, d_ff),
        st("w2").astype(MXU_DTYPE),              # (L, F, D)
        ln, b_out, fn,
    ]


def vision_transformer_encoder(x, layer_params, norm_params=None, n_heads=N_HEADS):
    """Pass (B, num_patches, d_model) through all encoder layers + optional final
    LayerNorm with a single fused pallas_call (activations + weights VMEM-resident)."""
    bsz, n, d = x.shape
    num_layers = len(layer_params)
    d_ff = layer_params[0]["w1"].shape[-1]
    args = _pack_params(layer_params, norm_params, d, d_ff)

    # additive block mask keeping attention within each batch element after folding
    # batch into the matmul-row axis (computed once in plain JAX, ~1 KB)
    row_id = jnp.arange(bsz * n, dtype=jnp.int32) // n
    attn_mask = jnp.where(row_id[:, None] == row_id[None, :], 0.0, -1e30
                          ).astype(jnp.float32)

    kernel = functools.partial(
        encoder_kernel, num_layers=num_layers, n_patch=n,
        n_heads=n_heads, apply_final_norm=norm_params is not None)

    vmem_spec = pl.BlockSpec(memory_space=pltpu.MemorySpace.VMEM)
    out = pl.pallas_call(
        kernel,
        out_shape=jax.ShapeDtypeStruct((bsz * n, d), x.dtype),
        in_specs=[vmem_spec] * (2 + len(args)),
        out_specs=vmem_spec,
    )(x.reshape(bsz * n, d), attn_mask, *args)
    return out.reshape(bsz, n, d)


# ------------------------- deterministic parameter init -------------------------

def make_layer_params(key, d_model, d_ff):
    ks = jax.random.split(key, 12)
    scale = 0.02

    def dense(k, din, dout):
        return jax.random.normal(k, (din, dout), jnp.float32) * scale

    def vec(k, dim):
        return jax.random.normal(k, (dim,), jnp.float32) * scale

    return dict(
        ln1_g=jnp.ones((d_model,), jnp.float32),
        ln1_b=jnp.zeros((d_model,), jnp.float32),
        wq=dense(ks[0], d_model, d_model), bq=vec(ks[1], d_model),
        wk=dense(ks[2], d_model, d_model), bk=vec(ks[3], d_model),
        wv=dense(ks[4], d_model, d_model), bv=vec(ks[5], d_model),
        wo=dense(ks[6], d_model, d_model), bo=vec(ks[7], d_model),
        ln2_g=jnp.ones((d_model,), jnp.float32),
        ln2_b=jnp.zeros((d_model,), jnp.float32),
        w1=dense(ks[8], d_model, d_ff), b1=vec(ks[9], d_ff),
        w2=dense(ks[10], d_ff, d_model), b2=vec(ks[11], d_model),
    )


if __name__ == "__main__":
    key = jax.random.PRNGKey(0)
    keys = jax.random.split(key, NUM_LAYERS + 1)
    x = jax.random.normal(keys[0], (B, N_PATCH, D_MODEL), jnp.float32)

    layer_params = [make_layer_params(keys[i + 1], D_MODEL, D_FF)
                    for i in range(NUM_LAYERS)]
    norm_params = dict(g=jnp.ones((D_MODEL,), jnp.float32),
                       b=jnp.zeros((D_MODEL,), jnp.float32))

    out = vision_transformer_encoder(x, layer_params, norm_params)
    jax.block_until_ready(out)
    assert out.shape == (B, N_PATCH, D_MODEL)
    assert bool(jnp.all(jnp.isfinite(out)))
    print("KERNEL_OK")
</pallas_src>

<mosaic_0001>
module attributes {stable_mosaic.version = 11 : i64} {
  func.func @encoder_kernel(%arg0: memref<16x32xf32, #tpu.memory_space<vmem>>, %arg1: memref<16x16xf32, #tpu.memory_space<vmem>>, %arg2: memref<2x32x96xbf16, #tpu.memory_space<vmem>>, %arg3: memref<2x1x96xf32, #tpu.memory_space<vmem>>, %arg4: memref<2x32x32xbf16, #tpu.memory_space<vmem>>, %arg5: memref<2x32x64xbf16, #tpu.memory_space<vmem>>, %arg6: memref<2x1x64xf32, #tpu.memory_space<vmem>>, %arg7: memref<2x64x32xbf16, #tpu.memory_space<vmem>>, %arg8: memref<2x4x32xf32, #tpu.memory_space<vmem>>, %arg9: memref<2x2x32xf32, #tpu.memory_space<vmem>>, %arg10: memref<2x32xf32, #tpu.memory_space<vmem>>, %arg11: memref<16x32xf32, #tpu.memory_space<vmem>>) attributes {dimension_semantics = [], scalar_prefetch = 0 : i64, scratch_operands = 0 : i64, tpu.core_type = #tpu.core_type<tc>} {
    %c0 = arith.constant 0 : index
    %c0_0 = arith.constant 0 : index
    %0 = vector.load %arg1[%c0, %c0_0] : memref<16x16xf32, #tpu.memory_space<vmem>>, vector<16x16xf32>
    %c0_1 = arith.constant 0 : index
    %c0_2 = arith.constant 0 : index
    %1 = vector.load %arg0[%c0_1, %c0_2] : memref<16x32xf32, #tpu.memory_space<vmem>>, vector<16x32xf32>
    %c0_3 = arith.constant 0 : index
    %c0_4 = arith.constant 0 : index
    %c0_5 = arith.constant 0 : index
    %2 = vector.load %arg8[%c0_3, %c0_4, %c0_5] : memref<2x4x32xf32, #tpu.memory_space<vmem>>, vector<1x4x32xf32>
    %3 = vector.shape_cast %2 : vector<1x4x32xf32> to vector<4x32xf32>
    %c0_6 = arith.constant 0 : index
    %c0_7 = arith.constant 0 : index
    %c0_8 = arith.constant 0 : index
    %4 = vector.load %arg9[%c0_6, %c0_7, %c0_8] : memref<2x2x32xf32, #tpu.memory_space<vmem>>, vector<1x2x32xf32>
    %5 = vector.shape_cast %4 : vector<1x2x32xf32> to vector<2x32xf32>
    %6 = vector.extract_strided_slice %3 {offsets = [0, 0], sizes = [1, 32], strides = [1, 1]} : vector<4x32xf32> to vector<1x32xf32>
    %7 = vector.extract_strided_slice %3 {offsets = [1, 0], sizes = [1, 32], strides = [1, 1]} : vector<4x32xf32> to vector<1x32xf32>
    %cst = arith.constant dense<0.000000e+00> : vector<16xf32>
    %8 = vector.multi_reduction <add>, %1, %cst [1] : vector<16x32xf32> to vector<16xf32>
    %9 = vector.shape_cast %8 : vector<16xf32> to vector<16x1xf32>
    %cst_9 = arith.constant 3.200000e+01 : f32
    %10 = vector.broadcast %cst_9 : f32 to vector<16x1xf32>
    %11 = arith.divf %9, %10 : vector<16x1xf32>
    %12 = vector.broadcast %11 : vector<16x1xf32> to vector<16x32xf32>
    %13 = arith.subf %1, %12 : vector<16x32xf32>
    %14 = arith.mulf %13, %13 : vector<16x32xf32>
    %cst_10 = arith.constant dense<0.000000e+00> : vector<16xf32>
    %15 = vector.multi_reduction <add>, %14, %cst_10 [1] : vector<16x32xf32> to vector<16xf32>
    %16 = vector.shape_cast %15 : vector<16xf32> to vector<16x1xf32>
    %cst_11 = arith.constant 3.200000e+01 : f32
    %17 = vector.broadcast %cst_11 : f32 to vector<16x1xf32>
    %18 = arith.divf %16, %17 : vector<16x1xf32>
    %19 = vector.broadcast %11 : vector<16x1xf32> to vector<16x32xf32>
    %20 = arith.subf %1, %19 : vector<16x32xf32>
    %cst_12 = arith.constant 9.99999974E-6 : f32
    %21 = vector.broadcast %cst_12 : f32 to vector<16x1xf32>
    %22 = arith.addf %18, %21 : vector<16x1xf32>
    %23 = math.rsqrt %22 : vector<16x1xf32>
    %24 = vector.broadcast %23 : vector<16x1xf32> to vector<16x32xf32>
    %25 = arith.mulf %20, %24 : vector<16x32xf32>
    %26 = vector.broadcast %6 : vector<1x32xf32> to vector<16x32xf32>
    %27 = arith.mulf %25, %26 : vector<16x32xf32>
    %28 = vector.broadcast %7 : vector<1x32xf32> to vector<16x32xf32>
    %29 = arith.addf %27, %28 : vector<16x32xf32>
    %30 = arith.truncf %29 : vector<16x32xf32> to vector<16x32xbf16>
    %c0_13 = arith.constant 0 : index
    %c0_14 = arith.constant 0 : index
    %c0_15 = arith.constant 0 : index
    %31 = vector.load %arg2[%c0_13, %c0_14, %c0_15] : memref<2x32x96xbf16, #tpu.memory_space<vmem>>, vector<1x32x96xbf16>
    %32 = vector.shape_cast %31 : vector<1x32x96xbf16> to vector<32x96xbf16>
    %cst_16 = arith.constant dense<0.000000e+00> : vector<16x96xf32>
    %33 = tpu.matmul %30, %32, %cst_16 {dimension_numbers = #tpu.dot_dimension_numbers<[1], [0], [0], [1], [0, 0, 1, 1], [], []>} : vector<16x32xbf16>, vector<32x96xbf16>, vector<16x96xf32> -> vector<16x96xf32>
    %c0_17 = arith.constant 0 : index
    %c0_18 = arith.constant 0 : index
    %c0_19 = arith.constant 0 : index
    %34 = vector.load %arg3[%c0_17, %c0_18, %c0_19] : memref<2x1x96xf32, #tpu.memory_space<vmem>>, vector<1x1x96xf32>
    %35 = vector.shape_cast %34 : vector<1x1x96xf32> to vector<1x96xf32>
    %36 = vector.broadcast %35 : vector<1x96xf32> to vector<16x96xf32>
    %37 = arith.addf %33, %36 : vector<16x96xf32>
    %38 = vector.extract_strided_slice %37 {offsets = [0, 0], sizes = [16, 8], strides = [1, 1]} : vector<16x96xf32> to vector<16x8xf32>
    %39 = vector.extract_strided_slice %37 {offsets = [0, 32], sizes = [16, 8], strides = [1, 1]} : vector<16x96xf32> to vector<16x8xf32>
    %40 = vector.extract_strided_slice %37 {offsets = [0, 64], sizes = [16, 8], strides = [1, 1]} : vector<16x96xf32> to vector<16x8xf32>
    %41 = arith.truncf %38 : vector<16x8xf32> to vector<16x8xbf16>
    %42 = arith.truncf %39 : vector<16x8xf32> to vector<16x8xbf16>
    %cst_20 = arith.constant dense<0.000000e+00> : vector<16x16xf32>
    %43 = tpu.matmul %41, %42, %cst_20 {dimension_numbers = #tpu.dot_dimension_numbers<[1], [1], [0], [0], [0, 0, 1, 0], [], []>} : vector<16x8xbf16>, vector<16x8xbf16>, vector<16x16xf32> -> vector<16x16xf32>
    %cst_21 = arith.constant 0.353553385 : f32
    %44 = vector.broadcast %cst_21 : f32 to vector<16x16xf32>
    %45 = arith.mulf %43, %44 : vector<16x16xf32>
    %46 = arith.addf %45, %0 : vector<16x16xf32>
    %cst_22 = arith.constant dense<0xFF800000> : vector<16xf32>
    %47 = vector.multi_reduction <maximumf>, %46, %cst_22 [1] : vector<16x16xf32> to vector<16xf32>
    %48 = vector.shape_cast %47 : vector<16xf32> to vector<16x1xf32>
    %49 = vector.broadcast %48 : vector<16x1xf32> to vector<16x16xf32>
    %50 = arith.subf %46, %49 : vector<16x16xf32>
    %51 = math.exp %50 : vector<16x16xf32>
    %cst_23 = arith.constant dense<0.000000e+00> : vector<16xf32>
    %52 = vector.multi_reduction <add>, %51, %cst_23 [1] : vector<16x16xf32> to vector<16xf32>
    %53 = vector.shape_cast %52 : vector<16xf32> to vector<16x1xf32>
    %54 = vector.broadcast %53 : vector<16x1xf32> to vector<16x16xf32>
    %55 = arith.divf %51, %54 : vector<16x16xf32>
    %56 = arith.truncf %55 : vector<16x16xf32> to vector<16x16xbf16>
    %57 = arith.truncf %40 : vector<16x8xf32> to vector<16x8xbf16>
    %cst_24 = arith.constant dense<0.000000e+00> : vector<16x8xf32>
    %58 = tpu.matmul %56, %57, %cst_24 {dimension_numbers = #tpu.dot_dimension_numbers<[1], [0], [0], [1], [0, 0, 1, 1], [], []>} : vector<16x16xbf16>, vector<16x8xbf16>, vector<16x8xf32> -> vector<16x8xf32>
    %59 = vector.extract_strided_slice %37 {offsets = [0, 8], sizes = [16, 8], strides = [1, 1]} : vector<16x96xf32> to vector<16x8xf32>
    %60 = vector.extract_strided_slice %37 {offsets = [0, 40], sizes = [16, 8], strides = [1, 1]} : vector<16x96xf32> to vector<16x8xf32>
    %61 = vector.extract_strided_slice %37 {offsets = [0, 72], sizes = [16, 8], strides = [1, 1]} : vector<16x96xf32> to vector<16x8xf32>
    %62 = arith.truncf %59 : vector<16x8xf32> to vector<16x8xbf16>
    %63 = arith.truncf %60 : vector<16x8xf32> to vector<16x8xbf16>
    %cst_25 = arith.constant dense<0.000000e+00> : vector<16x16xf32>
    %64 = tpu.matmul %62, %63, %cst_25 {dimension_numbers = #tpu.dot_dimension_numbers<[1], [1], [0], [0], [0, 0, 1, 0], [], []>} : vector<16x8xbf16>, vector<16x8xbf16>, vector<16x16xf32> -> vector<16x16xf32>
    %cst_26 = arith.constant 0.353553385 : f32
    %65 = vector.broadcast %cst_26 : f32 to vector<16x16xf32>
    %66 = arith.mulf %64, %65 : vector<16x16xf32>
    %67 = arith.addf %66, %0 : vector<16x16xf32>
    %cst_27 = arith.constant dense<0xFF800000> : vector<16xf32>
    %68 = vector.multi_reduction <maximumf>, %67, %cst_27 [1] : vector<16x16xf32> to vector<16xf32>
    %69 = vector.shape_cast %68 : vector<16xf32> to vector<16x1xf32>
    %70 = vector.broadcast %69 : vector<16x1xf32> to vector<16x16xf32>
    %71 = arith.subf %67, %70 : vector<16x16xf32>
    %72 = math.exp %71 : vector<16x16xf32>
    %cst_28 = arith.constant dense<0.000000e+00> : vector<16xf32>
    %73 = vector.multi_reduction <add>, %72, %cst_28 [1] : vector<16x16xf32> to vector<16xf32>
    %74 = vector.shape_cast %73 : vector<16xf32> to vector<16x1xf32>
    %75 = vector.broadcast %74 : vector<16x1xf32> to vector<16x16xf32>
    %76 = arith.divf %72, %75 : vector<16x16xf32>
    %77 = arith.truncf %76 : vector<16x16xf32> to vector<16x16xbf16>
    %78 = arith.truncf %61 : vector<16x8xf32> to vector<16x8xbf16>
    %cst_29 = arith.constant dense<0.000000e+00> : vector<16x8xf32>
    %79 = tpu.matmul %77, %78, %cst_29 {dimension_numbers = #tpu.dot_dimension_numbers<[1], [0], [0], [1], [0, 0, 1, 1], [], []>} : vector<16x16xbf16>, vector<16x8xbf16>, vector<16x8xf32> -> vector<16x8xf32>
    %80 = vector.extract_strided_slice %37 {offsets = [0, 16], sizes = [16, 8], strides = [1, 1]} : vector<16x96xf32> to vector<16x8xf32>
    %81 = vector.extract_strided_slice %37 {offsets = [0, 48], sizes = [16, 8], strides = [1, 1]} : vector<16x96xf32> to vector<16x8xf32>
    %82 = vector.extract_strided_slice %37 {offsets = [0, 80], sizes = [16, 8], strides = [1, 1]} : vector<16x96xf32> to vector<16x8xf32>
    %83 = arith.truncf %80 : vector<16x8xf32> to vector<16x8xbf16>
    %84 = arith.truncf %81 : vector<16x8xf32> to vector<16x8xbf16>
    %cst_30 = arith.constant dense<0.000000e+00> : vector<16x16xf32>
    %85 = tpu.matmul %83, %84, %cst_30 {dimension_numbers = #tpu.dot_dimension_numbers<[1], [1], [0], [0], [0, 0, 1, 0], [], []>} : vector<16x8xbf16>, vector<16x8xbf16>, vector<16x16xf32> -> vector<16x16xf32>
    %cst_31 = arith.constant 0.353553385 : f32
    %86 = vector.broadcast %cst_31 : f32 to vector<16x16xf32>
    %87 = arith.mulf %85, %86 : vector<16x16xf32>
    %88 = arith.addf %87, %0 : vector<16x16xf32>
    %cst_32 = arith.constant dense<0xFF800000> : vector<16xf32>
    %89 = vector.multi_reduction <maximumf>, %88, %cst_32 [1] : vector<16x16xf32> to vector<16xf32>
    %90 = vector.shape_cast %89 : vector<16xf32> to vector<16x1xf32>
    %91 = vector.broadcast %90 : vector<16x1xf32> to vector<16x16xf32>
    %92 = arith.subf %88, %91 : vector<16x16xf32>
    %93 = math.exp %92 : vector<16x16xf32>
    %cst_33 = arith.constant dense<0.000000e+00> : vector<16xf32>
    %94 = vector.multi_reduction <add>, %93, %cst_33 [1] : vector<16x16xf32> to vector<16xf32>
    %95 = vector.shape_cast %94 : vector<16xf32> to vector<16x1xf32>
    %96 = vector.broadcast %95 : vector<16x1xf32> to vector<16x16xf32>
    %97 = arith.divf %93, %96 : vector<16x16xf32>
    %98 = arith.truncf %97 : vector<16x16xf32> to vector<16x16xbf16>
    %99 = arith.truncf %82 : vector<16x8xf32> to vector<16x8xbf16>
    %cst_34 = arith.constant dense<0.000000e+00> : vector<16x8xf32>
    %100 = tpu.matmul %98, %99, %cst_34 {dimension_numbers = #tpu.dot_dimension_numbers<[1], [0], [0], [1], [0, 0, 1, 1], [], []>} : vector<16x16xbf16>, vector<16x8xbf16>, vector<16x8xf32> -> vector<16x8xf32>
    %101 = vector.extract_strided_slice %37 {offsets = [0, 24], sizes = [16, 8], strides = [1, 1]} : vector<16x96xf32> to vector<16x8xf32>
    %102 = vector.extract_strided_slice %37 {offsets = [0, 56], sizes = [16, 8], strides = [1, 1]} : vector<16x96xf32> to vector<16x8xf32>
    %103 = vector.extract_strided_slice %37 {offsets = [0, 88], sizes = [16, 8], strides = [1, 1]} : vector<16x96xf32> to vector<16x8xf32>
    %104 = arith.truncf %101 : vector<16x8xf32> to vector<16x8xbf16>
    %105 = arith.truncf %102 : vector<16x8xf32> to vector<16x8xbf16>
    %cst_35 = arith.constant dense<0.000000e+00> : vector<16x16xf32>
    %106 = tpu.matmul %104, %105, %cst_35 {dimension_numbers = #tpu.dot_dimension_numbers<[1], [1], [0], [0], [0, 0, 1, 0], [], []>} : vector<16x8xbf16>, vector<16x8xbf16>, vector<16x16xf32> -> vector<16x16xf32>
    %cst_36 = arith.constant 0.353553385 : f32
    %107 = vector.broadcast %cst_36 : f32 to vector<16x16xf32>
    %108 = arith.mulf %106, %107 : vector<16x16xf32>
    %109 = arith.addf %108, %0 : vector<16x16xf32>
    %cst_37 = arith.constant dense<0xFF800000> : vector<16xf32>
    %110 = vector.multi_reduction <maximumf>, %109, %cst_37 [1] : vector<16x16xf32> to vector<16xf32>
    %111 = vector.shape_cast %110 : vector<16xf32> to vector<16x1xf32>
    %112 = vector.broadcast %111 : vector<16x1xf32> to vector<16x16xf32>
    %113 = arith.subf %109, %112 : vector<16x16xf32>
    %114 = math.exp %113 : vector<16x16xf32>
    %cst_38 = arith.constant dense<0.000000e+00> : vector<16xf32>
    %115 = vector.multi_reduction <add>, %114, %cst_38 [1] : vector<16x16xf32> to vector<16xf32>
    %116 = vector.shape_cast %115 : vector<16xf32> to vector<16x1xf32>
    %117 = vector.broadcast %116 : vector<16x1xf32> to vector<16x16xf32>
    %118 = arith.divf %114, %117 : vector<16x16xf32>
    %119 = arith.truncf %118 : vector<16x16xf32> to vector<16x16xbf16>
    %120 = arith.truncf %103 : vector<16x8xf32> to vector<16x8xbf16>
    %cst_39 = arith.constant dense<0.000000e+00> : vector<16x8xf32>
    %121 = tpu.matmul %119, %120, %cst_39 {dimension_numbers = #tpu.dot_dimension_numbers<[1], [0], [0], [1], [0, 0, 1, 1], [], []>} : vector<16x16xbf16>, vector<16x8xbf16>, vector<16x8xf32> -> vector<16x8xf32>
    %122 = tpu.concatenate %58, %79, %100, %121 in 1 : vector<16x8xf32>, vector<16x8xf32>, vector<16x8xf32>, vector<16x8xf32> -> vector<16x32xf32>
    %123 = arith.truncf %122 : vector<16x32xf32> to vector<16x32xbf16>
    %c0_40 = arith.constant 0 : index
    %c0_41 = arith.constant 0 : index
    %c0_42 = arith.constant 0 : index
    %124 = vector.load %arg4[%c0_40, %c0_41, %c0_42] : memref<2x32x32xbf16, #tpu.memory_space<vmem>>, vector<1x32x32xbf16>
    %125 = vector.shape_cast %124 : vector<1x32x32xbf16> to vector<32x32xbf16>
    %cst_43 = arith.constant dense<0.000000e+00> : vector<16x32xf32>
    %126 = tpu.matmul %123, %125, %cst_43 {dimension_numbers = #tpu.dot_dimension_numbers<[1], [0], [0], [1], [0, 0, 1, 1], [], []>} : vector<16x32xbf16>, vector<32x32xbf16>, vector<16x32xf32> -> vector<16x32xf32>
    %127 = vector.extract_strided_slice %5 {offsets = [0, 0], sizes = [1, 32], strides = [1, 1]} : vector<2x32xf32> to vector<1x32xf32>
    %128 = vector.broadcast %127 : vector<1x32xf32> to vector<16x32xf32>
    %129 = arith.addf %126, %128 : vector<16x32xf32>
    %130 = arith.addf %1, %129 : vector<16x32xf32>
    %131 = vector.extract_strided_slice %3 {offsets = [2, 0], sizes = [1, 32], strides = [1, 1]} : vector<4x32xf32> to vector<1x32xf32>
    %132 = vector.extract_strided_slice %3 {offsets = [3, 0], sizes = [1, 32], strides = [1, 1]} : vector<4x32xf32> to vector<1x32xf32>
    %cst_44 = arith.constant dense<0.000000e+00> : vector<16xf32>
    %133 = vector.multi_reduction <add>, %130, %cst_44 [1] : vector<16x32xf32> to vector<16xf32>
    %134 = vector.shape_cast %133 : vector<16xf32> to vector<16x1xf32>
    %cst_45 = arith.constant 3.200000e+01 : f32
    %135 = vector.broadcast %cst_45 : f32 to vector<16x1xf32>
    %136 = arith.divf %134, %135 : vector<16x1xf32>
    %137 = vector.broadcast %136 : vector<16x1xf32> to vector<16x32xf32>
    %138 = arith.subf %130, %137 : vector<16x32xf32>
    %139 = arith.mulf %138, %138 : vector<16x32xf32>
    %cst_46 = arith.constant dense<0.000000e+00> : vector<16xf32>
    %140 = vector.multi_reduction <add>, %139, %cst_46 [1] : vector<16x32xf32> to vector<16xf32>
    %141 = vector.shape_cast %140 : vector<16xf32> to vector<16x1xf32>
    %cst_47 = arith.constant 3.200000e+01 : f32
    %142 = vector.broadcast %cst_47 : f32 to vector<16x1xf32>
    %143 = arith.divf %141, %142 : vector<16x1xf32>
    %144 = vector.broadcast %136 : vector<16x1xf32> to vector<16x32xf32>
    %145 = arith.subf %130, %144 : vector<16x32xf32>
    %cst_48 = arith.constant 9.99999974E-6 : f32
    %146 = vector.broadcast %cst_48 : f32 to vector<16x1xf32>
    %147 = arith.addf %143, %146 : vector<16x1xf32>
    %148 = math.rsqrt %147 : vector<16x1xf32>
    %149 = vector.broadcast %148 : vector<16x1xf32> to vector<16x32xf32>
    %150 = arith.mulf %145, %149 : vector<16x32xf32>
    %151 = vector.broadcast %131 : vector<1x32xf32> to vector<16x32xf32>
    %152 = arith.mulf %150, %151 : vector<16x32xf32>
    %153 = vector.broadcast %132 : vector<1x32xf32> to vector<16x32xf32>
    %154 = arith.addf %152, %153 : vector<16x32xf32>
    %155 = arith.truncf %154 : vector<16x32xf32> to vector<16x32xbf16>
    %c0_49 = arith.constant 0 : index
    %c0_50 = arith.constant 0 : index
    %c0_51 = arith.constant 0 : index
    %156 = vector.load %arg5[%c0_49, %c0_50, %c0_51] : memref<2x32x64xbf16, #tpu.memory_space<vmem>>, vector<1x32x64xbf16>
    %157 = vector.shape_cast %156 : vector<1x32x64xbf16> to vector<32x64xbf16>
    %cst_52 = arith.constant dense<0.000000e+00> : vector<16x64xf32>
    %158 = tpu.matmul %155, %157, %cst_52 {dimension_numbers = #tpu.dot_dimension_numbers<[1], [0], [0], [1], [0, 0, 1, 1], [], []>} : vector<16x32xbf16>, vector<32x64xbf16>, vector<16x64xf32> -> vector<16x64xf32>
    %c0_53 = arith.constant 0 : index
    %c0_54 = arith.constant 0 : index
    %c0_55 = arith.constant 0 : index
    %159 = vector.load %arg6[%c0_53, %c0_54, %c0_55] : memref<2x1x64xf32, #tpu.memory_space<vmem>>, vector<1x1x64xf32>
    %160 = vector.shape_cast %159 : vector<1x1x64xf32> to vector<1x64xf32>
    %161 = vector.broadcast %160 : vector<1x64xf32> to vector<16x64xf32>
    %162 = arith.addf %158, %161 : vector<16x64xf32>
    %163 = arith.mulf %162, %162 : vector<16x64xf32>
    %164 = arith.mulf %162, %163 : vector<16x64xf32>
    %cst_56 = arith.constant 4.471500e-02 : f32
    %165 = vector.broadcast %cst_56 : f32 to vector<16x64xf32>
    %166 = arith.mulf %165, %164 : vector<16x64xf32>
    %167 = arith.addf %162, %166 : vector<16x64xf32>
    %cst_57 = arith.constant 0.797884583 : f32
    %168 = vector.broadcast %cst_57 : f32 to vector<16x64xf32>
    %169 = arith.mulf %168, %167 : vector<16x64xf32>
    %170 = math.tanh %169 : vector<16x64xf32>
    %cst_58 = arith.constant 1.000000e+00 : f32
    %171 = vector.broadcast %cst_58 : f32 to vector<16x64xf32>
    %172 = arith.addf %171, %170 : vector<16x64xf32>
    %cst_59 = arith.constant 5.000000e-01 : f32
    %173 = vector.broadcast %cst_59 : f32 to vector<16x64xf32>
    %174 = arith.mulf %173, %172 : vector<16x64xf32>
    %175 = arith.mulf %162, %174 : vector<16x64xf32>
    %176 = arith.truncf %175 : vector<16x64xf32> to vector<16x64xbf16>
    %c0_60 = arith.constant 0 : index
    %c0_61 = arith.constant 0 : index
    %c0_62 = arith.constant 0 : index
    %177 = vector.load %arg7[%c0_60, %c0_61, %c0_62] : memref<2x64x32xbf16, #tpu.memory_space<vmem>>, vector<1x64x32xbf16>
    %178 = vector.shape_cast %177 : vector<1x64x32xbf16> to vector<64x32xbf16>
    %cst_63 = arith.constant dense<0.000000e+00> : vector<16x32xf32>
    %179 = tpu.matmul %176, %178, %cst_63 {dimension_numbers = #tpu.dot_dimension_numbers<[1], [0], [0], [1], [0, 0, 1, 1], [], []>} : vector<16x64xbf16>, vector<64x32xbf16>, vector<16x32xf32> -> vector<16x32xf32>
    %180 = vector.extract_strided_slice %5 {offsets = [1, 0], sizes = [1, 32], strides = [1, 1]} : vector<2x32xf32> to vector<1x32xf32>
    %181 = vector.broadcast %180 : vector<1x32xf32> to vector<16x32xf32>
    %182 = arith.addf %179, %181 : vector<16x32xf32>
    %183 = arith.addf %130, %182 : vector<16x32xf32>
    %c1 = arith.constant 1 : index
    %c0_64 = arith.constant 0 : index
    %c0_65 = arith.constant 0 : index
    %184 = vector.load %arg8[%c1, %c0_64, %c0_65] : memref<2x4x32xf32, #tpu.memory_space<vmem>>, vector<1x4x32xf32>
    %185 = vector.shape_cast %184 : vector<1x4x32xf32> to vector<4x32xf32>
    %c1_66 = arith.constant 1 : index
    %c0_67 = arith.constant 0 : index
    %c0_68 = arith.constant 0 : index
    %186 = vector.load %arg9[%c1_66, %c0_67, %c0_68] : memref<2x2x32xf32, #tpu.memory_space<vmem>>, vector<1x2x32xf32>
    %187 = vector.shape_cast %186 : vector<1x2x32xf32> to vector<2x32xf32>
    %188 = vector.extract_strided_slice %185 {offsets = [0, 0], sizes = [1, 32], strides = [1, 1]} : vector<4x32xf32> to vector<1x32xf32>
    %189 = vector.extract_strided_slice %185 {offsets = [1, 0], sizes = [1, 32], strides = [1, 1]} : vector<4x32xf32> to vector<1x32xf32>
    %cst_69 = arith.constant dense<0.000000e+00> : vector<16xf32>
    %190 = vector.multi_reduction <add>, %183, %cst_69 [1] : vector<16x32xf32> to vector<16xf32>
    %191 = vector.shape_cast %190 : vector<16xf32> to vector<16x1xf32>
    %cst_70 = arith.constant 3.200000e+01 : f32
    %192 = vector.broadcast %cst_70 : f32 to vector<16x1xf32>
    %193 = arith.divf %191, %192 : vector<16x1xf32>
    %194 = vector.broadcast %193 : vector<16x1xf32> to vector<16x32xf32>
    %195 = arith.subf %183, %194 : vector<16x32xf32>
    %196 = arith.mulf %195, %195 : vector<16x32xf32>
    %cst_71 = arith.constant dense<0.000000e+00> : vector<16xf32>
    %197 = vector.multi_reduction <add>, %196, %cst_71 [1] : vector<16x32xf32> to vector<16xf32>
    %198 = vector.shape_cast %197 : vector<16xf32> to vector<16x1xf32>
    %cst_72 = arith.constant 3.200000e+01 : f32
    %199 = vector.broadcast %cst_72 : f32 to vector<16x1xf32>
    %200 = arith.divf %198, %199 : vector<16x1xf32>
    %201 = vector.broadcast %193 : vector<16x1xf32> to vector<16x32xf32>
    %202 = arith.subf %183, %201 : vector<16x32xf32>
    %cst_73 = arith.constant 9.99999974E-6 : f32
    %203 = vector.broadcast %cst_73 : f32 to vector<16x1xf32>
    %204 = arith.addf %200, %203 : vector<16x1xf32>
    %205 = math.rsqrt %204 : vector<16x1xf32>
    %206 = vector.broadcast %205 : vector<16x1xf32> to vector<16x32xf32>
    %207 = arith.mulf %202, %206 : vector<16x32xf32>
    %208 = vector.broadcast %188 : vector<1x32xf32> to vector<16x32xf32>
    %209 = arith.mulf %207, %208 : vector<16x32xf32>
    %210 = vector.broadcast %189 : vector<1x32xf32> to vector<16x32xf32>
    %211 = arith.addf %209, %210 : vector<16x32xf32>
    %212 = arith.truncf %211 : vector<16x32xf32> to vector<16x32xbf16>
    %c1_74 = arith.constant 1 : index
    %c0_75 = arith.constant 0 : index
    %c0_76 = arith.constant 0 : index
    %213 = vector.load %arg2[%c1_74, %c0_75, %c0_76] : memref<2x32x96xbf16, #tpu.memory_space<vmem>>, vector<1x32x96xbf16>
    %214 = vector.shape_cast %213 : vector<1x32x96xbf16> to vector<32x96xbf16>
    %cst_77 = arith.constant dense<0.000000e+00> : vector<16x96xf32>
    %215 = tpu.matmul %212, %214, %cst_77 {dimension_numbers = #tpu.dot_dimension_numbers<[1], [0], [0], [1], [0, 0, 1, 1], [], []>} : vector<16x32xbf16>, vector<32x96xbf16>, vector<16x96xf32> -> vector<16x96xf32>
    %c1_78 = arith.constant 1 : index
    %c0_79 = arith.constant 0 : index
    %c0_80 = arith.constant 0 : index
    %216 = vector.load %arg3[%c1_78, %c0_79, %c0_80] : memref<2x1x96xf32, #tpu.memory_space<vmem>>, vector<1x1x96xf32>
    %217 = vector.shape_cast %216 : vector<1x1x96xf32> to vector<1x96xf32>
    %218 = vector.broadcast %217 : vector<1x96xf32> to vector<16x96xf32>
    %219 = arith.addf %215, %218 : vector<16x96xf32>
    %220 = vector.extract_strided_slice %219 {offsets = [0, 0], sizes = [16, 8], strides = [1, 1]} : vector<16x96xf32> to vector<16x8xf32>
    %221 = vector.extract_strided_slice %219 {offsets = [0, 32], sizes = [16, 8], strides = [1, 1]} : vector<16x96xf32> to vector<16x8xf32>
    %222 = vector.extract_strided_slice %219 {offsets = [0, 64], sizes = [16, 8], strides = [1, 1]} : vector<16x96xf32> to vector<16x8xf32>
    %223 = arith.truncf %220 : vector<16x8xf32> to vector<16x8xbf16>
    %224 = arith.truncf %221 : vector<16x8xf32> to vector<16x8xbf16>
    %cst_81 = arith.constant dense<0.000000e+00> : vector<16x16xf32>
    %225 = tpu.matmul %223, %224, %cst_81 {dimension_numbers = #tpu.dot_dimension_numbers<[1], [1], [0], [0], [0, 0, 1, 0], [], []>} : vector<16x8xbf16>, vector<16x8xbf16>, vector<16x16xf32> -> vector<16x16xf32>
    %cst_82 = arith.constant 0.353553385 : f32
    %226 = vector.broadcast %cst_82 : f32 to vector<16x16xf32>
    %227 = arith.mulf %225, %226 : vector<16x16xf32>
    %228 = arith.addf %227, %0 : vector<16x16xf32>
    %cst_83 = arith.constant dense<0xFF800000> : vector<16xf32>
    %229 = vector.multi_reduction <maximumf>, %228, %cst_83 [1] : vector<16x16xf32> to vector<16xf32>
    %230 = vector.shape_cast %229 : vector<16xf32> to vector<16x1xf32>
    %231 = vector.broadcast %230 : vector<16x1xf32> to vector<16x16xf32>
    %232 = arith.subf %228, %231 : vector<16x16xf32>
    %233 = math.exp %232 : vector<16x16xf32>
    %cst_84 = arith.constant dense<0.000000e+00> : vector<16xf32>
    %234 = vector.multi_reduction <add>, %233, %cst_84 [1] : vector<16x16xf32> to vector<16xf32>
    %235 = vector.shape_cast %234 : vector<16xf32> to vector<16x1xf32>
    %236 = vector.broadcast %235 : vector<16x1xf32> to vector<16x16xf32>
    %237 = arith.divf %233, %236 : vector<16x16xf32>
    %238 = arith.truncf %237 : vector<16x16xf32> to vector<16x16xbf16>
    %239 = arith.truncf %222 : vector<16x8xf32> to vector<16x8xbf16>
    %cst_85 = arith.constant dense<0.000000e+00> : vector<16x8xf32>
    %240 = tpu.matmul %238, %239, %cst_85 {dimension_numbers = #tpu.dot_dimension_numbers<[1], [0], [0], [1], [0, 0, 1, 1], [], []>} : vector<16x16xbf16>, vector<16x8xbf16>, vector<16x8xf32> -> vector<16x8xf32>
    %241 = vector.extract_strided_slice %219 {offsets = [0, 8], sizes = [16, 8], strides = [1, 1]} : vector<16x96xf32> to vector<16x8xf32>
    %242 = vector.extract_strided_slice %219 {offsets = [0, 40], sizes = [16, 8], strides = [1, 1]} : vector<16x96xf32> to vector<16x8xf32>
    %243 = vector.extract_strided_slice %219 {offsets = [0, 72], sizes = [16, 8], strides = [1, 1]} : vector<16x96xf32> to vector<16x8xf32>
    %244 = arith.truncf %241 : vector<16x8xf32> to vector<16x8xbf16>
    %245 = arith.truncf %242 : vector<16x8xf32> to vector<16x8xbf16>
    %cst_86 = arith.constant dense<0.000000e+00> : vector<16x16xf32>
    %246 = tpu.matmul %244, %245, %cst_86 {dimension_numbers = #tpu.dot_dimension_numbers<[1], [1], [0], [0], [0, 0, 1, 0], [], []>} : vector<16x8xbf16>, vector<16x8xbf16>, vector<16x16xf32> -> vector<16x16xf32>
    %cst_87 = arith.constant 0.353553385 : f32
    %247 = vector.broadcast %cst_87 : f32 to vector<16x16xf32>
    %248 = arith.mulf %246, %247 : vector<16x16xf32>
    %249 = arith.addf %248, %0 : vector<16x16xf32>
    %cst_88 = arith.constant dense<0xFF800000> : vector<16xf32>
    %250 = vector.multi_reduction <maximumf>, %249, %cst_88 [1] : vector<16x16xf32> to vector<16xf32>
    %251 = vector.shape_cast %250 : vector<16xf32> to vector<16x1xf32>
    %252 = vector.broadcast %251 : vector<16x1xf32> to vector<16x16xf32>
    %253 = arith.subf %249, %252 : vector<16x16xf32>
    %254 = math.exp %253 : vector<16x16xf32>
    %cst_89 = arith.constant dense<0.000000e+00> : vector<16xf32>
    %255 = vector.multi_reduction <add>, %254, %cst_89 [1] : vector<16x16xf32> to vector<16xf32>
    %256 = vector.shape_cast %255 : vector<16xf32> to vector<16x1xf32>
    %257 = vector.broadcast %256 : vector<16x1xf32> to vector<16x16xf32>
    %258 = arith.divf %254, %257 : vector<16x16xf32>
    %259 = arith.truncf %258 : vector<16x16xf32> to vector<16x16xbf16>
    %260 = arith.truncf %243 : vector<16x8xf32> to vector<16x8xbf16>
    %cst_90 = arith.constant dense<0.000000e+00> : vector<16x8xf32>
    %261 = tpu.matmul %259, %260, %cst_90 {dimension_numbers = #tpu.dot_dimension_numbers<[1], [0], [0], [1], [0, 0, 1, 1], [], []>} : vector<16x16xbf16>, vector<16x8xbf16>, vector<16x8xf32> -> vector<16x8xf32>
    %262 = vector.extract_strided_slice %219 {offsets = [0, 16], sizes = [16, 8], strides = [1, 1]} : vector<16x96xf32> to vector<16x8xf32>
    %263 = vector.extract_strided_slice %219 {offsets = [0, 48], sizes = [16, 8], strides = [1, 1]} : vector<16x96xf32> to vector<16x8xf32>
    %264 = vector.extract_strided_slice %219 {offsets = [0, 80], sizes = [16, 8], strides = [1, 1]} : vector<16x96xf32> to vector<16x8xf32>
    %265 = arith.truncf %262 : vector<16x8xf32> to vector<16x8xbf16>
    %266 = arith.truncf %263 : vector<16x8xf32> to vector<16x8xbf16>
    %cst_91 = arith.constant dense<0.000000e+00> : vector<16x16xf32>
    %267 = tpu.matmul %265, %266, %cst_91 {dimension_numbers = #tpu.dot_dimension_numbers<[1], [1], [0], [0], [0, 0, 1, 0], [], []>} : vector<16x8xbf16>, vector<16x8xbf16>, vector<16x16xf32> -> vector<16x16xf32>
    %cst_92 = arith.constant 0.353553385 : f32
    %268 = vector.broadcast %cst_92 : f32 to vector<16x16xf32>
    %269 = arith.mulf %267, %268 : vector<16x16xf32>
    %270 = arith.addf %269, %0 : vector<16x16xf32>
    %cst_93 = arith.constant dense<0xFF800000> : vector<16xf32>
    %271 = vector.multi_reduction <maximumf>, %270, %cst_93 [1] : vector<16x16xf32> to vector<16xf32>
    %272 = vector.shape_cast %271 : vector<16xf32> to vector<16x1xf32>
    %273 = vector.broadcast %272 : vector<16x1xf32> to vector<16x16xf32>
    %274 = arith.subf %270, %273 : vector<16x16xf32>
    %275 = math.exp %274 : vector<16x16xf32>
    %cst_94 = arith.constant dense<0.000000e+00> : vector<16xf32>
    %276 = vector.multi_reduction <add>, %275, %cst_94 [1] : vector<16x16xf32> to vector<16xf32>
    %277 = vector.shape_cast %276 : vector<16xf32> to vector<16x1xf32>
    %278 = vector.broadcast %277 : vector<16x1xf32> to vector<16x16xf32>
    %279 = arith.divf %275, %278 : vector<16x16xf32>
    %280 = arith.truncf %279 : vector<16x16xf32> to vector<16x16xbf16>
    %281 = arith.truncf %264 : vector<16x8xf32> to vector<16x8xbf16>
    %cst_95 = arith.constant dense<0.000000e+00> : vector<16x8xf32>
    %282 = tpu.matmul %280, %281, %cst_95 {dimension_numbers = #tpu.dot_dimension_numbers<[1], [0], [0], [1], [0, 0, 1, 1], [], []>} : vector<16x16xbf16>, vector<16x8xbf16>, vector<16x8xf32> -> vector<16x8xf32>
    %283 = vector.extract_strided_slice %219 {offsets = [0, 24], sizes = [16, 8], strides = [1, 1]} : vector<16x96xf32> to vector<16x8xf32>
    %284 = vector.extract_strided_slice %219 {offsets = [0, 56], sizes = [16, 8], strides = [1, 1]} : vector<16x96xf32> to vector<16x8xf32>
    %285 = vector.extract_strided_slice %219 {offsets = [0, 88], sizes = [16, 8], strides = [1, 1]} : vector<16x96xf32> to vector<16x8xf32>
    %286 = arith.truncf %283 : vector<16x8xf32> to vector<16x8xbf16>
    %287 = arith.truncf %284 : vector<16x8xf32> to vector<16x8xbf16>
    %cst_96 = arith.constant dense<0.000000e+00> : vector<16x16xf32>
    %288 = tpu.matmul %286, %287, %cst_96 {dimension_numbers = #tpu.dot_dimension_numbers<[1], [1], [0], [0], [0, 0, 1, 0], [], []>} : vector<16x8xbf16>, vector<16x8xbf16>, vector<16x16xf32> -> vector<16x16xf32>
    %cst_97 = arith.constant 0.353553385 : f32
    %289 = vector.broadcast %cst_97 : f32 to vector<16x16xf32>
    %290 = arith.mulf %288, %289 : vector<16x16xf32>
    %291 = arith.addf %290, %0 : vector<16x16xf32>
    %cst_98 = arith.constant dense<0xFF800000> : vector<16xf32>
    %292 = vector.multi_reduction <maximumf>, %291, %cst_98 [1] : vector<16x16xf32> to vector<16xf32>
    %293 = vector.shape_cast %292 : vector<16xf32> to vector<16x1xf32>
    %294 = vector.broadcast %293 : vector<16x1xf32> to vector<16x16xf32>
    %295 = arith.subf %291, %294 : vector<16x16xf32>
    %296 = math.exp %295 : vector<16x16xf32>
    %cst_99 = arith.constant dense<0.000000e+00> : vector<16xf32>
    %297 = vector.multi_reduction <add>, %296, %cst_99 [1] : vector<16x16xf32> to vector<16xf32>
    %298 = vector.shape_cast %297 : vector<16xf32> to vector<16x1xf32>
    %299 = vector.broadcast %298 : vector<16x1xf32> to vector<16x16xf32>
    %300 = arith.divf %296, %299 : vector<16x16xf32>
    %301 = arith.truncf %300 : vector<16x16xf32> to vector<16x16xbf16>
    %302 = arith.truncf %285 : vector<16x8xf32> to vector<16x8xbf16>
    %cst_100 = arith.constant dense<0.000000e+00> : vector<16x8xf32>
    %303 = tpu.matmul %301, %302, %cst_100 {dimension_numbers = #tpu.dot_dimension_numbers<[1], [0], [0], [1], [0, 0, 1, 1], [], []>} : vector<16x16xbf16>, vector<16x8xbf16>, vector<16x8xf32> -> vector<16x8xf32>
    %304 = tpu.concatenate %240, %261, %282, %303 in 1 : vector<16x8xf32>, vector<16x8xf32>, vector<16x8xf32>, vector<16x8xf32> -> vector<16x32xf32>
    %305 = arith.truncf %304 : vector<16x32xf32> to vector<16x32xbf16>
    %c1_101 = arith.constant 1 : index
    %c0_102 = arith.constant 0 : index
    %c0_103 = arith.constant 0 : index
    %306 = vector.load %arg4[%c1_101, %c0_102, %c0_103] : memref<2x32x32xbf16, #tpu.memory_space<vmem>>, vector<1x32x32xbf16>
    %307 = vector.shape_cast %306 : vector<1x32x32xbf16> to vector<32x32xbf16>
    %cst_104 = arith.constant dense<0.000000e+00> : vector<16x32xf32>
    %308 = tpu.matmul %305, %307, %cst_104 {dimension_numbers = #tpu.dot_dimension_numbers<[1], [0], [0], [1], [0, 0, 1, 1], [], []>} : vector<16x32xbf16>, vector<32x32xbf16>, vector<16x32xf32> -> vector<16x32xf32>
    %309 = vector.extract_strided_slice %187 {offsets = [0, 0], sizes = [1, 32], strides = [1, 1]} : vector<2x32xf32> to vector<1x32xf32>
    %310 = vector.broadcast %309 : vector<1x32xf32> to vector<16x32xf32>
    %311 = arith.addf %308, %310 : vector<16x32xf32>
    %312 = arith.addf %183, %311 : vector<16x32xf32>
    %313 = vector.extract_strided_slice %185 {offsets = [2, 0], sizes = [1, 32], strides = [1, 1]} : vector<4x32xf32> to vector<1x32xf32>
    %314 = vector.extract_strided_slice %185 {offsets = [3, 0], sizes = [1, 32], strides = [1, 1]} : vector<4x32xf32> to vector<1x32xf32>
    %cst_105 = arith.constant dense<0.000000e+00> : vector<16xf32>
    %315 = vector.multi_reduction <add>, %312, %cst_105 [1] : vector<16x32xf32> to vector<16xf32>
    %316 = vector.shape_cast %315 : vector<16xf32> to vector<16x1xf32>
    %cst_106 = arith.constant 3.200000e+01 : f32
    %317 = vector.broadcast %cst_106 : f32 to vector<16x1xf32>
    %318 = arith.divf %316, %317 : vector<16x1xf32>
    %319 = vector.broadcast %318 : vector<16x1xf32> to vector<16x32xf32>
    %320 = arith.subf %312, %319 : vector<16x32xf32>
    %321 = arith.mulf %320, %320 : vector<16x32xf32>
    %cst_107 = arith.constant dense<0.000000e+00> : vector<16xf32>
    %322 = vector.multi_reduction <add>, %321, %cst_107 [1] : vector<16x32xf32> to vector<16xf32>
    %323 = vector.shape_cast %322 : vector<16xf32> to vector<16x1xf32>
    %cst_108 = arith.constant 3.200000e+01 : f32
    %324 = vector.broadcast %cst_108 : f32 to vector<16x1xf32>
    %325 = arith.divf %323, %324 : vector<16x1xf32>
    %326 = vector.broadcast %318 : vector<16x1xf32> to vector<16x32xf32>
    %327 = arith.subf %312, %326 : vector<16x32xf32>
    %cst_109 = arith.constant 9.99999974E-6 : f32
    %328 = vector.broadcast %cst_109 : f32 to vector<16x1xf32>
    %329 = arith.addf %325, %328 : vector<16x1xf32>
    %330 = math.rsqrt %329 : vector<16x1xf32>
    %331 = vector.broadcast %330 : vector<16x1xf32> to vector<16x32xf32>
    %332 = arith.mulf %327, %331 : vector<16x32xf32>
    %333 = vector.broadcast %313 : vector<1x32xf32> to vector<16x32xf32>
    %334 = arith.mulf %332, %333 : vector<16x32xf32>
    %335 = vector.broadcast %314 : vector<1x32xf32> to vector<16x32xf32>
    %336 = arith.addf %334, %335 : vector<16x32xf32>
    %337 = arith.truncf %336 : vector<16x32xf32> to vector<16x32xbf16>
    %c1_110 = arith.constant 1 : index
    %c0_111 = arith.constant 0 : index
    %c0_112 = arith.constant 0 : index
    %338 = vector.load %arg5[%c1_110, %c0_111, %c0_112] : memref<2x32x64xbf16, #tpu.memory_space<vmem>>, vector<1x32x64xbf16>
    %339 = vector.shape_cast %338 : vector<1x32x64xbf16> to vector<32x64xbf16>
    %cst_113 = arith.constant dense<0.000000e+00> : vector<16x64xf32>
    %340 = tpu.matmul %337, %339, %cst_113 {dimension_numbers = #tpu.dot_dimension_numbers<[1], [0], [0], [1], [0, 0, 1, 1], [], []>} : vector<16x32xbf16>, vector<32x64xbf16>, vector<16x64xf32> -> vector<16x64xf32>
    %c1_114 = arith.constant 1 : index
    %c0_115 = arith.constant 0 : index
    %c0_116 = arith.constant 0 : index
    %341 = vector.load %arg6[%c1_114, %c0_115, %c0_116] : memref<2x1x64xf32, #tpu.memory_space<vmem>>, vector<1x1x64xf32>
    %342 = vector.shape_cast %341 : vector<1x1x64xf32> to vector<1x64xf32>
    %343 = vector.broadcast %342 : vector<1x64xf32> to vector<16x64xf32>
    %344 = arith.addf %340, %343 : vector<16x64xf32>
    %345 = arith.mulf %344, %344 : vector<16x64xf32>
    %346 = arith.mulf %344, %345 : vector<16x64xf32>
    %cst_117 = arith.constant 4.471500e-02 : f32
    %347 = vector.broadcast %cst_117 : f32 to vector<16x64xf32>
    %348 = arith.mulf %347, %346 : vector<16x64xf32>
    %349 = arith.addf %344, %348 : vector<16x64xf32>
    %cst_118 = arith.constant 0.797884583 : f32
    %350 = vector.broadcast %cst_118 : f32 to vector<16x64xf32>
    %351 = arith.mulf %350, %349 : vector<16x64xf32>
    %352 = math.tanh %351 : vector<16x64xf32>
    %cst_119 = arith.constant 1.000000e+00 : f32
    %353 = vector.broadcast %cst_119 : f32 to vector<16x64xf32>
    %354 = arith.addf %353, %352 : vector<16x64xf32>
    %cst_120 = arith.constant 5.000000e-01 : f32
    %355 = vector.broadcast %cst_120 : f32 to vector<16x64xf32>
    %356 = arith.mulf %355, %354 : vector<16x64xf32>
    %357 = arith.mulf %344, %356 : vector<16x64xf32>
    %358 = arith.truncf %357 : vector<16x64xf32> to vector<16x64xbf16>
    %c1_121 = arith.constant 1 : index
    %c0_122 = arith.constant 0 : index
    %c0_123 = arith.constant 0 : index
    %359 = vector.load %arg7[%c1_121, %c0_122, %c0_123] : memref<2x64x32xbf16, #tpu.memory_space<vmem>>, vector<1x64x32xbf16>
    %360 = vector.shape_cast %359 : vector<1x64x32xbf16> to vector<64x32xbf16>
    %cst_124 = arith.constant dense<0.000000e+00> : vector<16x32xf32>
    %361 = tpu.matmul %358, %360, %cst_124 {dimension_numbers = #tpu.dot_dimension_numbers<[1], [0], [0], [1], [0, 0, 1, 1], [], []>} : vector<16x64xbf16>, vector<64x32xbf16>, vector<16x32xf32> -> vector<16x32xf32>
    %362 = vector.extract_strided_slice %187 {offsets = [1, 0], sizes = [1, 32], strides = [1, 1]} : vector<2x32xf32> to vector<1x32xf32>
    %363 = vector.broadcast %362 : vector<1x32xf32> to vector<16x32xf32>
    %364 = arith.addf %361, %363 : vector<16x32xf32>
    %365 = arith.addf %312, %364 : vector<16x32xf32>
    %c0_125 = arith.constant 0 : index
    %c0_126 = arith.constant 0 : index
    %366 = vector.load %arg10[%c0_125, %c0_126] : memref<2x32xf32, #tpu.memory_space<vmem>>, vector<1x32xf32>
    %c1_127 = arith.constant 1 : index
    %c0_128 = arith.constant 0 : index
    %367 = vector.load %arg10[%c1_127, %c0_128] : memref<2x32xf32, #tpu.memory_space<vmem>>, vector<1x32xf32>
    %cst_129 = arith.constant dense<0.000000e+00> : vector<16xf32>
    %368 = vector.multi_reduction <add>, %365, %cst_129 [1] : vector<16x32xf32> to vector<16xf32>
    %369 = vector.shape_cast %368 : vector<16xf32> to vector<16x1xf32>
    %cst_130 = arith.constant 3.200000e+01 : f32
    %370 = vector.broadcast %cst_130 : f32 to vector<16x1xf32>
    %371 = arith.divf %369, %370 : vector<16x1xf32>
    %372 = vector.broadcast %371 : vector<16x1xf32> to vector<16x32xf32>
    %373 = arith.subf %365, %372 : vector<16x32xf32>
    %374 = arith.mulf %373, %373 : vector<16x32xf32>
    %cst_131 = arith.constant dense<0.000000e+00> : vector<16xf32>
    %375 = vector.multi_reduction <add>, %374, %cst_131 [1] : vector<16x32xf32> to vector<16xf32>
    %376 = vector.shape_cast %375 : vector<16xf32> to vector<16x1xf32>
    %cst_132 = arith.constant 3.200000e+01 : f32
    %377 = vector.broadcast %cst_132 : f32 to vector<16x1xf32>
    %378 = arith.divf %376, %377 : vector<16x1xf32>
    %379 = vector.broadcast %371 : vector<16x1xf32> to vector<16x32xf32>
    %380 = arith.subf %365, %379 : vector<16x32xf32>
    %cst_133 = arith.constant 9.99999974E-6 : f32
    %381 = vector.broadcast %cst_133 : f32 to vector<16x1xf32>
    %382 = arith.addf %378, %381 : vector<16x1xf32>
    %383 = math.rsqrt %382 : vector<16x1xf32>
    %384 = vector.broadcast %383 : vector<16x1xf32> to vector<16x32xf32>
    %385 = arith.mulf %380, %384 : vector<16x32xf32>
    %386 = vector.broadcast %366 : vector<1x32xf32> to vector<16x32xf32>
    %387 = arith.mulf %385, %386 : vector<16x32xf32>
    %388 = vector.broadcast %367 : vector<1x32xf32> to vector<16x32xf32>
    %389 = arith.addf %387, %388 : vector<16x32xf32>
    %c0_134 = arith.constant 0 : index
    %c0_135 = arith.constant 0 : index
    %390 = vector.load %arg11[%c0_134, %c0_135] : memref<16x32xf32, #tpu.memory_space<vmem>>, vector<16x32xf32>
    tpu.vector_store %arg11[%c0_134, %c0_135], %389 {strides = array<i32>} : memref<16x32xf32, #tpu.memory_space<vmem>>, vector<16x32xf32>,
    return
  }
}

</mosaic_0001>

<llo_original>
// kernel: tpu_custom_call.1
$region0: #{tpu_custom_call.1}
  #allocation0 [shape = 'u32[]', space=smem, size = 0x4, offset = 0x4, fixed_abs, tag = 'smem constant byte address 0x4 - core index']
  #allocation1 [shape = 'u32[72,128]{1,0:T(1,128)}', space=vmem, size = 0x9000, scoped, tag = 'internal scratch']
  %s0 = inlined_call_operand.hbm [shape: f32[16,32], index: 0, kind: input, shape index: {}]
  %s1 = inlined_call_operand.hbm [shape: f32[16,16], index: 1, kind: input, shape index: {}]
  %s2 = inlined_call_operand.vmem [shape: bf16[2,32,96], index: 2, kind: input, shape index: {}]
  %s3 = inlined_call_operand.hbm [shape: f32[2,1,96], index: 3, kind: input, shape index: {}]
  %s4 = inlined_call_operand.vmem [shape: bf16[2,32,32], index: 4, kind: input, shape index: {}]
  %s5 = inlined_call_operand.vmem [shape: bf16[2,32,64], index: 5, kind: input, shape index: {}]
  %s6 = inlined_call_operand.hbm [shape: f32[2,1,64], index: 6, kind: input, shape index: {}]
  %s7 = inlined_call_operand.vmem [shape: bf16[2,64,32], index: 7, kind: input, shape index: {}]
  %s8 = inlined_call_operand.hbm [shape: f32[2,4,32], index: 8, kind: input, shape index: {}]
  %s9 = inlined_call_operand.vmem [shape: f32[2,2,32], index: 9, kind: input, shape index: {}]
  %s10 = inlined_call_operand.vmem [shape: f32[2,32], index: 10, kind: input, shape index: {}]
  %s11 = inlined_call_operand.hbm [shape: f32[16,32], index: 11, kind: output, shape index: {}]
  %s12 = sld [smem:[#allocation0]]
  $region74: #{tpu_custom_call.1} parent=0
    _
  %s14 = ssub.s32 1, %s12
  %s15 = scalar_select 0, %s14, %s12
  $region1: #{tpu_custom_call.1} parent=0
    #allocation2 [shape = 'u8[8192]{0}', space=vmem, size = 0x2000, scoped, tag = 'input window, operand 0, single buffered']
    #allocation3 [shape = 's32[1]{0}', space=sflag, size = 0x4, scoped, tag = 'scoped memory for tpu_custom_call.1']
    #allocation4 [shape = 's32[1]{0}', space=sflag, size = 0x4, scoped, tag = 'scoped memory for tpu_custom_call.1']
    #allocation5 [shape = 'u8[8192]{0}', space=vmem, size = 0x2000, scoped, tag = 'input window, operand 1, single buffered']
    #allocation6 [shape = 's32[1]{0}', space=sflag, size = 0x4, scoped, tag = 'scoped memory for tpu_custom_call.1']
    #allocation7 [shape = 'u8[1024]{0}', space=vmem, size = 0x400, scoped, tag = 'input window, operand 3, single buffered']
    #allocation8 [shape = 'u8[1024]{0}', space=vmem, size = 0x400, scoped, tag = 'input window, operand 6, single buffered']
    #allocation9 [shape = 's32[1]{0}', space=sflag, size = 0x4, scoped, tag = 'scoped memory for tpu_custom_call.1']
    #allocation10 [shape = 'u8[4096]{0}', space=vmem, size = 0x1000, scoped, tag = 'input window, operand 8, single buffered']
    #allocation11 [shape = 'u8[8192]{0}', space=vmem, size = 0x2000, scoped, tag = 'output window, operand 0, single buffered']
    %16 = vsyncpa [#allocation3], 0
    %17 = vsyncpa [#allocation6], 0
    %18 = vsyncpa [#allocation9], 0
    %19 = vsyncpa [#allocation4], 0
    // Predicated region
    $region2: #{tpu_custom_call.1} parent=1 // pred_check
      _
    $region3: #{tpu_custom_call.1} parent=1 // pred_check_branch
      %21 = sbr.rel (0) target = $region5
    $region4: #{tpu_custom_call.1} parent=1 // pred_region
      %23 = vsyncadd [#allocation3], 0
      %s24 = sshll.u32 %s0, 4
      %s25 = int_to_ptr.hbm [resolvable:$true] %s24
      %s26 = sshll.u32 [#allocation2], 4
      %s27 = int_to_ptr.vmem [resolvable:$true] %s26
      %32 = dma.hbm_to_vmem [thread:$0]  %s25, 256, %s27, [#allocation3], 128, 128, 8
    $region5: #{tpu_custom_call.1} parent=1 // pred_fallthru
      _
    // Predicated region
    $region6: #{tpu_custom_call.1} parent=1 // pred_check
      _
    $region7: #{tpu_custom_call.1} parent=1 // pred_check_branch
      %34 = sbr.rel (0) target = $region9
    $region8: #{tpu_custom_call.1} parent=1 // pred_region
      %36 = vsyncadd [#allocation6], 0
      %s37 = sshll.u32 %s1, 4
      %s38 = int_to_ptr.hbm [resolvable:$true] %s37
      %s39 = sshll.u32 [#allocation5], 4
      %s40 = int_to_ptr.vmem [resolvable:$true] %s39
      %45 = dma.hbm_to_vmem [thread:$0]  %s38, 256, %s40, [#allocation6], 128, 128, 8
    $region9: #{tpu_custom_call.1} parent=1 // pred_fallthru
      _
    // Predicated region
    $region10: #{tpu_custom_call.1} parent=1 // pred_check
      _
    $region11: #{tpu_custom_call.1} parent=1 // pred_check_branch
      %47 = sbr.rel (0) target = $region13
    $region12: #{tpu_custom_call.1} parent=1 // pred_region
      _
    $region13: #{tpu_custom_call.1} parent=1 // pred_fallthru
      _
    // Predicated region
    $region14: #{tpu_custom_call.1} parent=1 // pred_check
      _
    $region15: #{tpu_custom_call.1} parent=1 // pred_check_branch
      %49 = sbr.rel (0) target = $region17
    $region16: #{tpu_custom_call.1} parent=1 // pred_region
      %51 = vsyncadd [#allocation6], 0
      %s52 = sshll.u32 %s3, 4
      %s53 = int_to_ptr.hbm [resolvable:$true] %s52
      %s54 = sshll.u32 [#allocation7], 4
      %s55 = int_to_ptr.vmem [resolvable:$true] %s54
      %60 = dma.hbm_to_vmem [thread:$0]  %s53, 32, %s55, [#allocation6], 16, 16, 1
    $region17: #{tpu_custom_call.1} parent=1 // pred_fallthru
      _
    // Predicated region
    $region18: #{tpu_custom_call.1} parent=1 // pred_check
      _
    $region19: #{tpu_custom_call.1} parent=1 // pred_check_branch
      %62 = sbr.rel (0) target = $region21
    $region20: #{tpu_custom_call.1} parent=1 // pred_region
      _
    $region21: #{tpu_custom_call.1} parent=1 // pred_fallthru
      _
    // Predicated region
    $region22: #{tpu_custom_call.1} parent=1 // pred_check
      _
    $region23: #{tpu_custom_call.1} parent=1 // pred_check_branch
      %64 = sbr.rel (0) target = $region25
    $region24: #{tpu_custom_call.1} parent=1 // pred_region
      _
    $region25: #{tpu_custom_call.1} parent=1 // pred_fallthru
      _
    // Predicated region
    $region26: #{tpu_custom_call.1} parent=1 // pred_check
      _
    $region27: #{tpu_custom_call.1} parent=1 // pred_check_branch
      %66 = sbr.rel (0) target = $region29
    $region28: #{tpu_custom_call.1} parent=1 // pred_region
      %68 = vsyncadd [#allocation9], 0
      %s69 = sshll.u32 %s6, 4
      %s70 = int_to_ptr.hbm [resolvable:$true] %s69
      %s71 = sshll.u32 [#allocation8], 4
      %s72 = int_to_ptr.vmem [resolvable:$true] %s71
      %77 = dma.hbm_to_vmem [thread:$0]  %s70, 32, %s72, [#allocation9], 16, 16, 1
    $region29: #{tpu_custom_call.1} parent=1 // pred_fallthru
      _
    // Predicated region
    $region30: #{tpu_custom_call.1} parent=1 // pred_check
      _
    $region31: #{tpu_custom_call.1} parent=1 // pred_check_branch
      %79 = sbr.rel (0) target = $region33
    $region32: #{tpu_custom_call.1} parent=1 // pred_region
      _
    $region33: #{tpu_custom_call.1} parent=1 // pred_fallthru
      _
    // Predicated region
    $region34: #{tpu_custom_call.1} parent=1 // pred_check
      _
    $region35: #{tpu_custom_call.1} parent=1 // pred_check_branch
      %81 = sbr.rel (0) target = $region37
    $region36: #{tpu_custom_call.1} parent=1 // pred_region
      %83 = vsyncadd [#allocation9], 0
      %s84 = sshll.u32 %s8, 4
      %s85 = int_to_ptr.hbm [resolvable:$true] %s84
      %s86 = sshll.u32 [#allocation10], 4
      %s87 = int_to_ptr.vmem [resolvable:$true] %s86
      %92 = dma.hbm_to_vmem [thread:$0]  %s85, 128, %s87, [#allocation9], 64, 64, 4
    $region37: #{tpu_custom_call.1} parent=1 // pred_fallthru
      _
    // Predicated region
    $region38: #{tpu_custom_call.1} parent=1 // pred_check
      _
    $region39: #{tpu_custom_call.1} parent=1 // pred_check_branch
      %94 = sbr.rel (0) target = $region41
    $region40: #{tpu_custom_call.1} parent=1 // pred_region
      _
    $region41: #{tpu_custom_call.1} parent=1 // pred_fallthru
      _
    // Predicated region
    $region42: #{tpu_custom_call.1} parent=1 // pred_check
      _
    $region43: #{tpu_custom_call.1} parent=1 // pred_check_branch
      %96 = sbr.rel (0) target = $region45
    $region44: #{tpu_custom_call.1} parent=1 // pred_region
      _
    $region45: #{tpu_custom_call.1} parent=1 // pred_fallthru
      _
    // Predicated region
    $region46: #{tpu_custom_call.1} parent=1 // pred_check
      _
    $region47: #{tpu_custom_call.1} parent=1 // pred_check_branch
      %98 = sbr.rel (0) target = $region49
    $region48: #{tpu_custom_call.1} parent=1 // pred_region
      %100 = dma.done [#allocation3], 256
    $region49: #{tpu_custom_call.1} parent=1 // pred_fallthru
      _
    // Predicated region
    $region50: #{tpu_custom_call.1} parent=1 // pred_check
      _
    $region51: #{tpu_custom_call.1} parent=1 // pred_check_branch
      %102 = sbr.rel (0) target = $region53
    $region52: #{tpu_custom_call.1} parent=1 // pred_region
      %104 = dma.done [#allocation6], 256
    $region53: #{tpu_custom_call.1} parent=1 // pred_fallthru
      _
    // Predicated region
    $region54: #{tpu_custom_call.1} parent=1 // pred_check
      _
    $region55: #{tpu_custom_call.1} parent=1 // pred_check_branch
      %106 = sbr.rel (0) target = $region57
    $region56: #{tpu_custom_call.1} parent=1 // pred_region
      %108 = dma.done [#allocation6], 32
    $region57: #{tpu_custom_call.1} parent=1 // pred_fallthru
      _
    // Predicated region
    $region58: #{tpu_custom_call.1} parent=1 // pred_check
      _
    $region59: #{tpu_custom_call.1} parent=1 // pred_check_branch
      %110 = sbr.rel (0) target = $region61
    $region60: #{tpu_custom_call.1} parent=1 // pred_region
      %112 = dma.done [#allocation9], 32
    $region61: #{tpu_custom_call.1} parent=1 // pred_fallthru
      _
    // Predicated region
    $region62: #{tpu_custom_call.1} parent=1 // pred_check
      _
    $region63: #{tpu_custom_call.1} parent=1 // pred_check_branch
      %114 = sbr.rel (0) target = $region65
    $region64: #{tpu_custom_call.1} parent=1 // pred_region
      %116 = dma.done [#allocation9], 128
    $region65: #{tpu_custom_call.1} parent=1 // pred_fallthru
      _
    %v118 = vld [vmem:[#allocation5] sm:$0xff]
    %v119 = vld [vmem:[#allocation5 + $0x8] sm:$0xff]
    %v120 = vld [vmem:[#allocation2] sm:$0xff]
    %v121 = vld [vmem:[#allocation2 + $0x8] sm:$0xff]
    %v122 = vld [vmem:[#allocation10] sm:$0xf]
    %v123 = vld [vmem:[%s9] sm:$0x3]
    %vm124 = vcmask 261120
    %v125 = vsel %vm124, %v120, 0.0
    %126 = vadd.xlane.f32.xlu0 %v125
    %v127 = vpop.xlane.xlu0 %126
    %v128 = vsel %vm124, %v121, 0.0
    %129 = vadd.xlane.f32.xlu0 %v128
    %v130 = vpop.xlane.xlu0 %129
    %v131 = vrcp.pop 32.0
    %v132 = vmul.f32 32.0, %v131
    %v133 = vsub.f32 1.0, %v132
    %v134 = vmul.f32 %v131, %v133
    %v135 = vadd.f32 %v131, %v134
    %vm136 = vweird.f32 %v131
    %v137 = vsel %vm136, %v131, %v135
    %v138 = vmul.f32 %v127, %v137
    %v139 = vmul.f32 %v130, %v137
    %v140 = vsub.f32 %v120, %v138
    %v141 = vsub.f32 %v121, %v139
    %v142 = vmul.f32 %v140, %v140
    %v143 = vmul.f32 %v141, %v141
    %v144 = vsel %vm124, %v142, 0.0
    %145 = vadd.xlane.f32.xlu0 %v144
    %v146 = vpop.xlane.xlu0 %145
    %v147 = vsel %vm124, %v143, 0.0
    %148 = vadd.xlane.f32.xlu0 %v147
    %v149 = vpop.xlane.xlu0 %148
    %v150 = vmul.f32 %v146, %v137
    %v151 = vmul.f32 %v149, %v137
    %v152 = vadd.f32 %v150, 1e-05
    %v153 = vadd.f32 %v151, 1e-05
    %v154 = vrsqrt.pop %v152
    %v155 = vmul.f32 %v154, %v152
    %v156 = vmul.f32 %v155, %v154
    %v157 = vmul.f32 0.5, %v156
    %v158 = vsub.f32 1.5, %v157
    %v159 = vmul.f32 %v154, %v158
    %vm160 = vweird.f32 %v152
    %vm161 = vweird.f32 %v154
    %vm162 = vmor %vm160, %vm161
    %v163 = vsel %vm162, %v154, %v159
    %v164 = vrsqrt.pop %v153
    %v165 = vmul.f32 %v164, %v153
    %v166 = vmul.f32 %v165, %v164
    %v167 = vmul.f32 0.5, %v166
    %v168 = vsub.f32 1.5, %v167
    %v169 = vmul.f32 %v164, %v168
    %vm170 = vweird.f32 %v153
    %vm171 = vweird.f32 %v164
    %vm172 = vmor %vm170, %vm171
    %v173 = vsel %vm172, %v164, %v169
    %v174 = vmul.f32 %v140, %v163
    %v175 = vmul.f32 %v141, %v173
    %v176 = vperm.slane %v122, 0
    %v177 = vmul.f32 %v174, %v176
    %v178 = vmul.f32 %v175, %v176
    %v179 = vperm.slane %v122, 1
    %v180 = vadd.f32 %v177, %v179
    %v181 = vadd.f32 %v178, %v179
    %v182 = vpack.c.bf16 %v181, %v180
    %v183 = vld [vmem:[%s2] sm:$0xf]
    %v184 = vld [vmem:[%s2 + $0x4] sm:$0xf]
    %v185 = vld [vmem:[%s2 + $0x8] sm:$0xf]
    %v186 = vld [vmem:[%s2 + $0xc] sm:$0xf]
    %v187 = vld [vmem:[#allocation7] sm:$0x1]
    %v189 = vperm.slane %v187, 0
    %v195 = vunpack.c.l.b16 %v183
    %v196 = vunpack.c.l.b16 %v184
    %v197 = vunpack.c.l.b16 %v185
    %v198 = vunpack.c.l.b16 %v186
    %v199 = vpack.c.b16 %v196, %v195
    %v200 = vpack.c.b16 %v198, %v197
    %v204 = vsel %vm124, %v182, 0
    %206 = vmatpush.bf16.msra.mxu0 0
    %207 = vmatpush.bf16.msra.mxu0 0
    %208 = vmatpush.bf16.msra.mxu0 0
    %209 = vmatpush.bf16.msra.mxu0 0
    %210 = vmatpush.bf16.msra.mxu0 0
    %211 = vmatpush.bf16.msra.mxu0 0
    %212 = vmatpush.bf16.msra.mxu0 %v200
    %213 = vmatpush.bf16.msra.mxu0 %v199
    %214 = vmatmul.bf16.gmra.mxu0 %v204
    %v215 = vpop.f32.mrf.mxu0
    %v216 = vadd.f32 %v189, %v215
    %v217 = vpop.f32.mrf.mxu0
    %v218 = vadd.f32 %v189, %v217
    %219 = vdwg.mxu0
    %v220 = vpack.c.bf16 %v218, %v216
    %222 = vrot.lane.b32.xlu0 %v220, 96
    %v223 = vpop.permute.xlu0 %222
    %vm224 = vcmask 64512
    %v226 = vsel %vm224, %v220, 0
    %v229 = vsel %vm224, %v223, 0
    %231 = vmatpush.bf16.xpose.msra.mxu0 0
    %232 = vmatpush.bf16.xpose.msra.mxu0 0
    %233 = vmatpush.bf16.xpose.msra.mxu0 0
    %234 = vmatpush.bf16.xpose.msra.mxu0 0
    %235 = vmatpush.bf16.xpose.msra.mxu0 0
    %236 = vmatpush.bf16.xpose.msra.mxu0 0
    %237 = vmatpush.bf16.xpose.msra.mxu0 0
    %238 = vmatpush.bf16.xpose.msra.mxu0 %v229
    %239 = vmatmul.bf16.gmra.mxu0 %v226
    %v240 = vpop.f32.mrf.mxu0
    %v241 = vadd.f32 0.0, %v240
    %v242 = vpop.f32.mrf.mxu0
    %v243 = vadd.f32 0.0, %v242
    %244 = vdwg.mxu0
    %v245 = vmul.f32 %v241, 0.35355338
    %v246 = vmul.f32 %v243, 0.35355338
    %v247 = vadd.f32 %v245, %v118
    %v248 = vadd.f32 %v246, %v119
    %vm249 = vcmask 130048
    %v250 = vsel %vm249, %v247, -inf
    %251 = vmax.xlane.f32.xlu0 %v250
    %v252 = vpop.xlane.xlu0 %251
    %v253 = vsel %vm249, %v248, -inf
    %254 = vmax.xlane.f32.xlu0 %v253
    %v255 = vpop.xlane.xlu0 %254
    %v256 = vsub.f32 %v247, %v252
    %v257 = vsub.f32 %v248, %v255
    %v258 = vmul.f32 %v256, 1.442695
    %v259 = vpow.pop %v258
    %v260 = vmul.f32 %v257, 1.442695
    %v261 = vpow.pop %v260
    %v262 = vsel %vm249, %v259, 0.0
    %263 = vadd.xlane.f32.xlu0 %v262
    %v264 = vpop.xlane.xlu0 %263
    %v265 = vsel %vm249, %v261, 0.0
    %266 = vadd.xlane.f32.xlu0 %v265
    %v267 = vpop.xlane.xlu0 %266
    %v268 = vrcp.pop %v264
    %v269 = vmul.f32 %v264, %v268
    %v270 = vsub.f32 1.0, %v269
    %v271 = vmul.f32 %v268, %v270
    %v272 = vadd.f32 %v268, %v271
    %vm273 = vweird.f32 %v264
    %vm274 = vweird.f32 %v268
    %vm275 = vmor %vm273, %vm274
    %v276 = vsel %vm275, %v268, %v272
    %v277 = vand.u32 2147483647, %v264
    %vm278 = vcmp.eq.f32.partialorder %v277, 8.507059e+37
    %v279 = vand.u32 %v264, 2147483648
    %v280 = vor.u32 1.1754944e-38, %v279
    %v281 = vsel %vm278, %v280, %v276
    %v282 = vmul.f32 %v259, %v281
    %v283 = vrcp.pop %v267
    %v284 = vmul.f32 %v267, %v283
    %v285 = vsub.f32 1.0, %v284
    %v286 = vmul.f32 %v283, %v285
    %v287 = vadd.f32 %v283, %v286
    %vm288 = vweird.f32 %v267
    %vm289 = vweird.f32 %v283
    %vm290 = vmor %vm288, %vm289
    %v291 = vsel %vm290, %v283, %v287
    %v292 = vand.u32 2147483647, %v267
    %vm293 = vcmp.eq.f32.partialorder %v292, 8.507059e+37
    %v294 = vand.u32 %v267, 2147483648
    %v295 = vor.u32 1.1754944e-38, %v294
    %v296 = vsel %vm293, %v295, %v291
    %v297 = vmul.f32 %v261, %v296
    %v298 = vpack.c.bf16 %v297, %v282
    %299 = vrot.lane.b32.xlu0 %v220, 64
    %v300 = vpop.permute.xlu0 %299
    %v303 = vsel %vm249, %v298, 0
    %305 = vmatpush.bf16.msra.mxu0 0
    %306 = vmatpush.bf16.msra.mxu0 0
    %307 = vmatpush.bf16.msra.mxu0 0
    %308 = vmatpush.bf16.msra.mxu0 0
    %309 = vmatpush.bf16.msra.mxu0 0
    %310 = vmatpush.bf16.msra.mxu0 0
    %311 = vmatpush.bf16.msra.mxu0 0
    %312 = vmatpush.bf16.msra.mxu0 %v300
    %313 = vmatmul.bf16.gmra.mxu0 %v303
    %v314 = vpop.f32.mrf.mxu0
    %v315 = vadd.f32 0.0, %v314
    %v316 = vpop.f32.mrf.mxu0
    %v317 = vadd.f32 0.0, %v316
    %318 = vdwg.mxu0
    %319 = vrot.lane.b32.xlu0 %v220, 120
    %v320 = vpop.permute.xlu0 %319
    %321 = vrot.lane.b32.xlu0 %v220, 88
    %v322 = vpop.permute.xlu0 %321
    %v324 = vsel %vm224, %v320, 0
    %v327 = vsel %vm224, %v322, 0
    %329 = vmatpush.bf16.xpose.msra.mxu0 0
    %330 = vmatpush.bf16.xpose.msra.mxu0 0
    %331 = vmatpush.bf16.xpose.msra.mxu0 0
    %332 = vmatpush.bf16.xpose.msra.mxu0 0
    %333 = vmatpush.bf16.xpose.msra.mxu0 0
    %334 = vmatpush.bf16.xpose.msra.mxu0 0
    %335 = vmatpush.bf16.xpose.msra.mxu0 0
    %336 = vmatpush.bf16.xpose.msra.mxu0 %v327
    %337 = vmatmul.bf16.gmra.mxu0 %v324
    %v338 = vpop.f32.mrf.mxu0
    %v339 = vadd.f32 0.0, %v338
    %v340 = vpop.f32.mrf.mxu0
    %v341 = vadd.f32 0.0, %v340
    %342 = vdwg.mxu0
    %v343 = vmul.f32 %v339, 0.35355338
    %v344 = vmul.f32 %v341, 0.35355338
    %v345 = vadd.f32 %v343, %v118
    %v346 = vadd.f32 %v344, %v119
    %v347 = vsel %vm249, %v345, -inf
    %348 = vmax.xlane.f32.xlu0 %v347
    %v349 = vpop.xlane.xlu0 %348
    %v350 = vsel %vm249, %v346, -inf
    %351 = vmax.xlane.f32.xlu0 %v350
    %v352 = vpop.xlane.xlu0 %351
    %v353 = vsub.f32 %v345, %v349
    %v354 = vsub.f32 %v346, %v352
    %v355 = vmul.f32 %v353, 1.442695
    %v356 = vpow.pop %v355
    %v357 = vmul.f32 %v354, 1.442695
    %v358 = vpow.pop %v357
    %v359 = vsel %vm249, %v356, 0.0
    %360 = vadd.xlane.f32.xlu0 %v359
    %v361 = vpop.xlane.xlu0 %360
    %v362 = vsel %vm249, %v358, 0.0
    %363 = vadd.xlane.f32.xlu0 %v362
    %v364 = vpop.xlane.xlu0 %363
    %v365 = vrcp.pop %v361
    %v366 = vmul.f32 %v361, %v365
    %v367 = vsub.f32 1.0, %v366
    %v368 = vmul.f32 %v365, %v367
    %v369 = vadd.f32 %v365, %v368
    %vm370 = vweird.f32 %v361
    %vm371 = vweird.f32 %v365
    %vm372 = vmor %vm370, %vm371
    %v373 = vsel %vm372, %v365, %v369
    %v374 = vand.u32 2147483647, %v361
    %vm375 = vcmp.eq.f32.partialorder %v374, 8.507059e+37
    %v376 = vand.u32 %v361, 2147483648
    %v377 = vor.u32 1.1754944e-38, %v376
    %v378 = vsel %vm375, %v377, %v373
    %v379 = vmul.f32 %v356, %v378
    %v380 = vrcp.pop %v364
    %v381 = vmul.f32 %v364, %v380
    %v382 = vsub.f32 1.0, %v381
    %v383 = vmul.f32 %v380, %v382
    %v384 = vadd.f32 %v380, %v383
    %vm385 = vweird.f32 %v364
    %vm386 = vweird.f32 %v380
    %vm387 = vmor %vm385, %vm386
    %v388 = vsel %vm387, %v380, %v384
    %v389 = vand.u32 2147483647, %v364
    %vm390 = vcmp.eq.f32.partialorder %v389, 8.507059e+37
    %v391 = vand.u32 %v364, 2147483648
    %v392 = vor.u32 1.1754944e-38, %v391
    %v393 = vsel %vm390, %v392, %v388
    %v394 = vmul.f32 %v358, %v393
    %v395 = vpack.c.bf16 %v394, %v379
    %396 = vrot.lane.b32.xlu0 %v220, 56
    %v397 = vpop.permute.xlu0 %396
    %v400 = vsel %vm249, %v395, 0
    %402 = vmatpush.bf16.msra.mxu0 0
    %403 = vmatpush.bf16.msra.mxu0 0
    %404 = vmatpush.bf16.msra.mxu0 0
    %405 = vmatpush.bf16.msra.mxu0 0
    %406 = vmatpush.bf16.msra.mxu0 0
    %407 = vmatpush.bf16.msra.mxu0 0
    %408 = vmatpush.bf16.msra.mxu0 0
    %409 = vmatpush.bf16.msra.mxu0 %v397
    %410 = vmatmul.bf16.gmra.mxu0 %v400
    %v411 = vpop.f32.mrf.mxu0
    %v412 = vadd.f32 0.0, %v411
    %v413 = vpop.f32.mrf.mxu0
    %v414 = vadd.f32 0.0, %v413
    %415 = vdwg.mxu0
    %416 = vrot.lane.b32.xlu0 %v220, 112
    %v417 = vpop.permute.xlu0 %416
    %418 = vrot.lane.b32.xlu0 %v220, 80
    %v419 = vpop.permute.xlu0 %418
    %v421 = vsel %vm224, %v417, 0
    %v424 = vsel %vm224, %v419, 0
    %426 = vmatpush.bf16.xpose.msra.mxu0 0
    %427 = vmatpush.bf16.xpose.msra.mxu0 0
    %428 = vmatpush.bf16.xpose.msra.mxu0 0
    %429 = vmatpush.bf16.xpose.msra.mxu0 0
    %430 = vmatpush.bf16.xpose.msra.mxu0 0
    %431 = vmatpush.bf16.xpose.msra.mxu0 0
    %432 = vmatpush.bf16.xpose.msra.mxu0 0
    %433 = vmatpush.bf16.xpose.msra.mxu0 %v424
    %434 = vmatmul.bf16.gmra.mxu0 %v421
    %v435 = vpop.f32.mrf.mxu0
    %v436 = vadd.f32 0.0, %v435
    %v437 = vpop.f32.mrf.mxu0
    %v438 = vadd.f32 0.0, %v437
    %439 = vdwg.mxu0
    %v440 = vmul.f32 %v436, 0.35355338
    %v441 = vmul.f32 %v438, 0.35355338
    %v442 = vadd.f32 %v440, %v118
    %v443 = vadd.f32 %v441, %v119
    %v444 = vsel %vm249, %v442, -inf
    %445 = vmax.xlane.f32.xlu0 %v444
    %v446 = vpop.xlane.xlu0 %445
    %v447 = vsel %vm249, %v443, -inf
    %448 = vmax.xlane.f32.xlu0 %v447
    %v449 = vpop.xlane.xlu0 %448
    %v450 = vsub.f32 %v442, %v446
    %v451 = vsub.f32 %v443, %v449
    %v452 = vmul.f32 %v450, 1.442695
    %v453 = vpow.pop %v452
    %v454 = vmul.f32 %v451, 1.442695
    %v455 = vpow.pop %v454
    %v456 = vsel %vm249, %v453, 0.0
    %457 = vadd.xlane.f32.xlu0 %v456
    %v458 = vpop.xlane.xlu0 %457
    %v459 = vsel %vm249, %v455, 0.0
    %460 = vadd.xlane.f32.xlu0 %v459
    %v461 = vpop.xlane.xlu0 %460
    %v462 = vrcp.pop %v458
    %v463 = vmul.f32 %v458, %v462
    %v464 = vsub.f32 1.0, %v463
    %v465 = vmul.f32 %v462, %v464
    %v466 = vadd.f32 %v462, %v465
    %vm467 = vweird.f32 %v458
    %vm468 = vweird.f32 %v462
    %vm469 = vmor %vm467, %vm468
    %v470 = vsel %vm469, %v462, %v466
    %v471 = vand.u32 2147483647, %v458
    %vm472 = vcmp.eq.f32.partialorder %v471, 8.507059e+37
    %v473 = vand.u32 %v458, 2147483648
    %v474 = vor.u32 1.1754944e-38, %v473
    %v475 = vsel %vm472, %v474, %v470
    %v476 = vmul.f32 %v453, %v475
    %v477 = vrcp.pop %v461
    %v478 = vmul.f32 %v461, %v477
    %v479 = vsub.f32 1.0, %v478
    %v480 = vmul.f32 %v477, %v479
    %v481 = vadd.f32 %v477, %v480
    %vm482 = vweird.f32 %v461
    %vm483 = vweird.f32 %v477
    %vm484 = vmor %vm482, %vm483
    %v485 = vsel %vm484, %v477, %v481
    %v486 = vand.u32 2147483647, %v461
    %vm487 = vcmp.eq.f32.partialorder %v486, 8.507059e+37
    %v488 = vand.u32 %v461, 2147483648
    %v489 = vor.u32 1.1754944e-38, %v488
    %v490 = vsel %vm487, %v489, %v485
    %v491 = vmul.f32 %v455, %v490
    %v492 = vpack.c.bf16 %v491, %v476
    %493 = vrot.lane.b32.xlu0 %v220, 48
    %v494 = vpop.permute.xlu0 %493
    %v497 = vsel %vm249, %v492, 0
    %499 = vmatpush.bf16.msra.mxu0 0
    %500 = vmatpush.bf16.msra.mxu0 0
    %501 = vmatpush.bf16.msra.mxu0 0
    %502 = vmatpush.bf16.msra.mxu0 0
    %503 = vmatpush.bf16.msra.mxu0 0
    %504 = vmatpush.bf16.msra.mxu0 0
    %505 = vmatpush.bf16.msra.mxu0 0
    %506 = vmatpush.bf16.msra.mxu0 %v494
    %507 = vmatmul.bf16.gmra.mxu0 %v497
    %v508 = vpop.f32.mrf.mxu0
    %v509 = vadd.f32 0.0, %v508
    %v510 = vpop.f32.mrf.mxu0
    %v511 = vadd.f32 0.0, %v510
    %512 = vdwg.mxu0
    %513 = vrot.lane.b32.xlu0 %v220, 104
    %v514 = vpop.permute.xlu0 %513
    %515 = vrot.lane.b32.xlu0 %v220, 72
    %v516 = vpop.permute.xlu0 %515
    %v518 = vsel %vm224, %v514, 0
    %v521 = vsel %vm224, %v516, 0
    %523 = vmatpush.bf16.xpose.msra.mxu0 0
    %524 = vmatpush.bf16.xpose.msra.mxu0 0
    %525 = vmatpush.bf16.xpose.msra.mxu0 0
    %526 = vmatpush.bf16.xpose.msra.mxu0 0
    %527 = vmatpush.bf16.xpose.msra.mxu0 0
    %528 = vmatpush.bf16.xpose.msra.mxu0 0
    %529 = vmatpush.bf16.xpose.msra.mxu0 0
    %530 = vmatpush.bf16.xpose.msra.mxu0 %v521
    %531 = vmatmul.bf16.gmra.mxu0 %v518
    %v532 = vpop.f32.mrf.mxu0
    %v533 = vadd.f32 0.0, %v532
    %v534 = vpop.f32.mrf.mxu0
    %v535 = vadd.f32 0.0, %v534
    %536 = vdwg.mxu0
    %v537 = vmul.f32 %v533, 0.35355338
    %v538 = vmul.f32 %v535, 0.35355338
    %v539 = vadd.f32 %v537, %v118
    %v540 = vadd.f32 %v538, %v119
    %v541 = vsel %vm249, %v539, -inf
    %542 = vmax.xlane.f32.xlu0 %v541
    %v543 = vpop.xlane.xlu0 %542
    %v544 = vsel %vm249, %v540, -inf
    %545 = vmax.xlane.f32.xlu0 %v544
    %v546 = vpop.xlane.xlu0 %545
    %v547 = vsub.f32 %v539, %v543
    %v548 = vsub.f32 %v540, %v546
    %v549 = vmul.f32 %v547, 1.442695
    %v550 = vpow.pop %v549
    %v551 = vmul.f32 %v548, 1.442695
    %v552 = vpow.pop %v551
    %v553 = vsel %vm249, %v550, 0.0
    %554 = vadd.xlane.f32.xlu0 %v553
    %v555 = vpop.xlane.xlu0 %554
    %v556 = vsel %vm249, %v552, 0.0
    %557 = vadd.xlane.f32.xlu0 %v556
    %v558 = vpop.xlane.xlu0 %557
    %v559 = vrcp.pop %v555
    %v560 = vmul.f32 %v555, %v559
    %v561 = vsub.f32 1.0, %v560
    %v562 = vmul.f32 %v559, %v561
    %v563 = vadd.f32 %v559, %v562
    %vm564 = vweird.f32 %v555
    %vm565 = vweird.f32 %v559
    %vm566 = vmor %vm564, %vm565
    %v567 = vsel %vm566, %v559, %v563
    %v568 = vand.u32 2147483647, %v555
    %vm569 = vcmp.eq.f32.partialorder %v568, 8.507059e+37
    %v570 = vand.u32 %v555, 2147483648
    %v571 = vor.u32 1.1754944e-38, %v570
    %v572 = vsel %vm569, %v571, %v567
    %v573 = vmul.f32 %v550, %v572
    %v574 = vrcp.pop %v558
    %v575 = vmul.f32 %v558, %v574
    %v576 = vsub.f32 1.0, %v575
    %v577 = vmul.f32 %v574, %v576
    %v578 = vadd.f32 %v574, %v577
    %vm579 = vweird.f32 %v558
    %vm580 = vweird.f32 %v574
    %vm581 = vmor %vm579, %vm580
    %v582 = vsel %vm581, %v574, %v578
    %v583 = vand.u32 2147483647, %v558
    %vm584 = vcmp.eq.f32.partialorder %v583, 8.507059e+37
    %v585 = vand.u32 %v558, 2147483648
    %v586 = vor.u32 1.1754944e-38, %v585
    %v587 = vsel %vm584, %v586, %v582
    %v588 = vmul.f32 %v552, %v587
    %v589 = vpack.c.bf16 %v588, %v573
    %590 = vrot.lane.b32.xlu0 %v220, 40
    %v591 = vpop.permute.xlu0 %590
    %v594 = vsel %vm249, %v589, 0
    %596 = vmatpush.bf16.msra.mxu0 0
    %597 = vmatpush.bf16.msra.mxu0 0
    %598 = vmatpush.bf16.msra.mxu0 0
    %599 = vmatpush.bf16.msra.mxu0 0
    %600 = vmatpush.bf16.msra.mxu0 0
    %601 = vmatpush.bf16.msra.mxu0 0
    %602 = vmatpush.bf16.msra.mxu0 0
    %603 = vmatpush.bf16.msra.mxu0 %v591
    %604 = vmatmul.bf16.gmra.mxu0 %v594
    %v605 = vpop.f32.mrf.mxu0
    %v606 = vadd.f32 0.0, %v605
    %v607 = vpop.f32.mrf.mxu0
    %v608 = vadd.f32 0.0, %v607
    %609 = vdwg.mxu0
    %612 = vrot.lane.b32.xlu0 %v412, 8
    %v613 = vpop.permute.xlu0 %612
    %614 = vrot.lane.b32.xlu0 %v414, 8
    %v615 = vpop.permute.xlu0 %614
    %620 = vrot.lane.b32.xlu0 %v509, 16
    %v621 = vpop.permute.xlu0 %620
    %622 = vrot.lane.b32.xlu0 %v511, 16
    %v623 = vpop.permute.xlu0 %622
    %628 = vrot.lane.b32.xlu0 %v606, 24
    %v629 = vpop.permute.xlu0 %628
    %630 = vrot.lane.b32.xlu0 %v608, 24
    %v631 = vpop.permute.xlu0 %630
    %v634 = vsel %vm224, %v315, %v613
    %v635 = vsel %vm224, %v317, %v615
    %v636 = vsel %vm249, %v634, %v621
    %v637 = vsel %vm249, %v635, %v623
    %vm638 = vcmask 195584
    %v639 = vsel %vm638, %v636, %v629
    %v640 = vsel %vm638, %v637, %v631
    %v641 = vpack.c.bf16 %v640, %v639
    %v642 = vld [vmem:[%s4] sm:$0xf]
    %v643 = vld [vmem:[%s4 + $0x4] sm:$0xf]
    %v644 = vld [vmem:[%s4 + $0x8] sm:$0xf]
    %v645 = vld [vmem:[%s4 + $0xc] sm:$0xf]
    %v646 = vperm.slane %v123, 0
    %v651 = vunpack.c.l.b16 %v642
    %v652 = vunpack.c.l.b16 %v643
    %v653 = vunpack.c.l.b16 %v644
    %v654 = vunpack.c.l.b16 %v645
    %v655 = vpack.c.b16 %v652, %v651
    %v656 = vpack.c.b16 %v654, %v653
    %v660 = vsel %vm124, %v641, 0
    %662 = vmatpush.bf16.msra.mxu0 0
    %663 = vmatpush.bf16.msra.mxu0 0
    %664 = vmatpush.bf16.msra.mxu0 0
    %665 = vmatpush.bf16.msra.mxu0 0
    %666 = vmatpush.bf16.msra.mxu0 0
    %667 = vmatpush.bf16.msra.mxu0 0
    %668 = vmatpush.bf16.msra.mxu0 %v656
    %669 = vmatpush.bf16.msra.mxu0 %v655
    %670 = vmatmul.bf16.gmra.mxu0 %v660
    %v671 = vpop.f32.mrf.mxu0
    %v672 = vadd.f32 %v646, %v671
    %v673 = vpop.f32.mrf.mxu0
    %v674 = vadd.f32 %v646, %v673
    %675 = vdwg.mxu0
    %v676 = vadd.f32 %v120, %v672
    %v677 = vadd.f32 %v121, %v674
    %v678 = vsel %vm124, %v676, 0.0
    %679 = vadd.xlane.f32.xlu0 %v678
    %v680 = vpop.xlane.xlu0 %679
    %v681 = vsel %vm124, %v677, 0.0
    %682 = vadd.xlane.f32.xlu0 %v681
    %v683 = vpop.xlane.xlu0 %682
    %v684 = vmul.f32 %v680, %v137
    %v685 = vmul.f32 %v683, %v137
    %v686 = vsub.f32 %v676, %v684
    %v687 = vsub.f32 %v677, %v685
    %v688 = vmul.f32 %v686, %v686
    %v689 = vmul.f32 %v687, %v687
    %v690 = vsel %vm124, %v688, 0.0
    %691 = vadd.xlane.f32.xlu0 %v690
    %v692 = vpop.xlane.xlu0 %691
    %v693 = vsel %vm124, %v689, 0.0
    %694 = vadd.xlane.f32.xlu0 %v693
    %v695 = vpop.xlane.xlu0 %694
    %v696 = vmul.f32 %v692, %v137
    %v697 = vmul.f32 %v695, %v137
    %v698 = vadd.f32 %v696, 1e-05
    %v699 = vadd.f32 %v697, 1e-05
    %v700 = vrsqrt.pop %v698
    %v701 = vmul.f32 %v700, %v698
    %v702 = vmul.f32 %v701, %v700
    %v703 = vmul.f32 0.5, %v702
    %v704 = vsub.f32 1.5, %v703
    %v705 = vmul.f32 %v700, %v704
    %vm706 = vweird.f32 %v698
    %vm707 = vweird.f32 %v700
    %vm708 = vmor %vm706, %vm707
    %v709 = vsel %vm708, %v700, %v705
    %v710 = vrsqrt.pop %v699
    %v711 = vmul.f32 %v710, %v699
    %v712 = vmul.f32 %v711, %v710
    %v713 = vmul.f32 0.5, %v712
    %v714 = vsub.f32 1.5, %v713
    %v715 = vmul.f32 %v710, %v714
    %vm716 = vweird.f32 %v699
    %vm717 = vweird.f32 %v710
    %vm718 = vmor %vm716, %vm717
    %v719 = vsel %vm718, %v710, %v715
    %v720 = vmul.f32 %v686, %v709
    %v721 = vmul.f32 %v687, %v719
    %v722 = vperm.slane %v122, 2
    %v723 = vmul.f32 %v720, %v722
    %v724 = vmul.f32 %v721, %v722
    %v725 = vperm.slane %v122, 3
    %v726 = vadd.f32 %v723, %v725
    %v727 = vadd.f32 %v724, %v725
    %v728 = vpack.c.bf16 %v727, %v726
    %v729 = vld [vmem:[%s5] sm:$0xf]
    %v730 = vld [vmem:[%s5 + $0x4] sm:$0xf]
    %v731 = vld [vmem:[%s5 + $0x8] sm:$0xf]
    %v732 = vld [vmem:[%s5 + $0xc] sm:$0xf]
    %v733 = vld [vmem:[#allocation8] sm:$0x1]
    %v735 = vperm.slane %v733, 0
    %v741 = vunpack.c.l.b16 %v729
    %v742 = vunpack.c.l.b16 %v730
    %v743 = vunpack.c.l.b16 %v731
    %v744 = vunpack.c.l.b16 %v732
    %v745 = vpack.c.b16 %v742, %v741
    %v746 = vpack.c.b16 %v744, %v743
    %v750 = vsel %vm124, %v728, 0
    %752 = vmatpush.bf16.msra.mxu0 0
    %753 = vmatpush.bf16.msra.mxu0 0
    %754 = vmatpush.bf16.msra.mxu0 0
    %755 = vmatpush.bf16.msra.mxu0 0
    %756 = vmatpush.bf16.msra.mxu0 0
    %757 = vmatpush.bf16.msra.mxu0 0
    %758 = vmatpush.bf16.msra.mxu0 %v746
    %759 = vmatpush.bf16.msra.mxu0 %v745
    %760 = vmatmul.bf16.gmra.mxu0 %v750
    %v761 = vpop.f32.mrf.mxu0
    %v762 = vadd.f32 %v735, %v761
    %v763 = vpop.f32.mrf.mxu0
    %v764 = vadd.f32 %v735, %v763
    %765 = vdwg.mxu0
    %v766 = vmul.f32 %v762, %v762
    %v767 = vmul.f32 %v764, %v764
    %v768 = vmul.f32 %v762, %v766
    %v769 = vmul.f32 %v764, %v767
    %v770 = vmul.f32 %v768, 0.044715
    %v771 = vmul.f32 %v769, 0.044715
    %v772 = vadd.f32 %v762, %v770
    %v773 = vadd.f32 %v764, %v771
    %v774 = vmul.f32 %v772, 0.7978846
    %v775 = vmul.f32 %v773, 0.7978846
    %v776 = vtanh.pop %v774
    %v777 = vtanh.pop %v775
    %v778 = vadd.f32 %v776, 1.0
    %v779 = vadd.f32 %v777, 1.0
    %v780 = vmul.f32 %v778, 0.5
    %v781 = vmul.f32 %v779, 0.5
    %v782 = vmul.f32 %v762, %v780
    %v783 = vmul.f32 %v764, %v781
    %v784 = vpack.c.bf16 %v783, %v782
    %v785 = vld [vmem:[%s7] sm:$0xf]
    %v786 = vld [vmem:[%s7 + $0x4] sm:$0xf]
    %v787 = vld [vmem:[%s7 + $0x8] sm:$0xf]
    %v788 = vld [vmem:[%s7 + $0xc] sm:$0xf]
    %v789 = vld [vmem:[%s7 + $0x10] sm:$0xf]
    %v790 = vld [vmem:[%s7 + $0x14] sm:$0xf]
    %v791 = vld [vmem:[%s7 + $0x18] sm:$0xf]
    %v792 = vld [vmem:[%s7 + $0x1c] sm:$0xf]
    %v793 = vperm.slane %v123, 1
    %v802 = vunpack.c.l.b16 %v785
    %v803 = vunpack.c.l.b16 %v786
    %v804 = vunpack.c.l.b16 %v787
    %v805 = vunpack.c.l.b16 %v788
    %v806 = vunpack.c.l.b16 %v789
    %v807 = vunpack.c.l.b16 %v790
    %v808 = vunpack.c.l.b16 %v791
    %v809 = vunpack.c.l.b16 %v792
    %v810 = vpack.c.b16 %v803, %v802
    %v811 = vpack.c.b16 %v805, %v804
    %v812 = vpack.c.b16 %v807, %v806
    %v813 = vpack.c.b16 %v809, %v808
    %vm818 = vcmask 523264
    %v820 = vsel %vm818, %v784, 0
    %822 = vmatpush.bf16.msra.mxu0 0
    %823 = vmatpush.bf16.msra.mxu0 0
    %824 = vmatpush.bf16.msra.mxu0 0
    %825 = vmatpush.bf16.msra.mxu0 0
    %826 = vmatpush.bf16.msra.mxu0 %v813
    %827 = vmatpush.bf16.msra.mxu0 %v812
    %828 = vmatpush.bf16.msra.mxu0 %v811
    %829 = vmatpush.bf16.msra.mxu0 %v810
    %830 = vmatmul.bf16.gmra.mxu0 %v820
    %v831 = vpop.f32.mrf.mxu0
    %v832 = vadd.f32 %v793, %v831
    %v833 = vpop.f32.mrf.mxu0
    %v834 = vadd.f32 %v793, %v833
    %835 = vdwg.mxu0
    %v836 = vadd.f32 %v676, %v832
    %v837 = vadd.f32 %v677, %v834
    %s838 = scalar_lea.vmem [#allocation10], 4
    %v839 = vld [vmem:[%s838] sm:$0xf]
    %s840 = scalar_lea.vmem %s9, 2
    %v841 = vld [vmem:[%s840] sm:$0x3]
    %v842 = vsel %vm124, %v836, 0.0
    %843 = vadd.xlane.f32.xlu0 %v842
    %v844 = vpop.xlane.xlu0 %843
    %v845 = vsel %vm124, %v837, 0.0
    %846 = vadd.xlane.f32.xlu0 %v845
    %v847 = vpop.xlane.xlu0 %846
    %v848 = vmul.f32 %v844, %v137
    %v849 = vmul.f32 %v847, %v137
    %v850 = vsub.f32 %v836, %v848
    %v851 = vsub.f32 %v837, %v849
    %v852 = vmul.f32 %v850, %v850
    %v853 = vmul.f32 %v851, %v851
    %v854 = vsel %vm124, %v852, 0.0
    %855 = vadd.xlane.f32.xlu0 %v854
    %v856 = vpop.xlane.xlu0 %855
    %v857 = vsel %vm124, %v853, 0.0
    %858 = vadd.xlane.f32.xlu0 %v857
    %v859 = vpop.xlane.xlu0 %858
    %v860 = vmul.f32 %v856, %v137
    %v861 = vmul.f32 %v859, %v137
    %v862 = vadd.f32 %v860, 1e-05
    %v863 = vadd.f32 %v861, 1e-05
    %v864 = vrsqrt.pop %v862
    %v865 = vmul.f32 %v864, %v862
    %v866 = vmul.f32 %v865, %v864
    %v867 = vmul.f32 0.5, %v866
    %v868 = vsub.f32 1.5, %v867
    %v869 = vmul.f32 %v864, %v868
    %vm870 = vweird.f32 %v862
    %vm871 = vweird.f32 %v864
    %vm872 = vmor %vm870, %vm871
    %v873 = vsel %vm872, %v864, %v869
    %v874 = vrsqrt.pop %v863
    %v875 = vmul.f32 %v874, %v863
    %v876 = vmul.f32 %v875, %v874
    %v877 = vmul.f32 0.5, %v876
    %v878 = vsub.f32 1.5, %v877
    %v879 = vmul.f32 %v874, %v878
    %vm880 = vweird.f32 %v863
    %vm881 = vweird.f32 %v874
    %vm882 = vmor %vm880, %vm881
    %v883 = vsel %vm882, %v874, %v879
    %v884 = vmul.f32 %v850, %v873
    %v885 = vmul.f32 %v851, %v883
    %v886 = vperm.slane %v839, 0
    %v887 = vmul.f32 %v884, %v886
    %v888 = vmul.f32 %v885, %v886
    %v889 = vperm.slane %v839, 1
    %v890 = vadd.f32 %v887, %v889
    %v891 = vadd.f32 %v888, %v889
    %v892 = vpack.c.bf16 %v891, %v890
    %s893 = scalar_lea.vmem %s2, 16
    %v894 = vld [vmem:[%s893] sm:$0xf]
    %v895 = vld [vmem:[%s893 + $0x4] sm:$0xf]
    %v896 = vld [vmem:[%s893 + $0x8] sm:$0xf]
    %v897 = vld [vmem:[%s893 + $0xc] sm:$0xf]
    %s898 = scalar_lea.vmem [#allocation7], 1
    %v899 = vld [vmem:[%s898] sm:$0x1]
    %v901 = vperm.slane %v899, 0
    %v907 = vunpack.c.l.b16 %v894
    %v908 = vunpack.c.l.b16 %v895
    %v909 = vunpack.c.l.b16 %v896
    %v910 = vunpack.c.l.b16 %v897
    %v911 = vpack.c.b16 %v908, %v907
    %v912 = vpack.c.b16 %v910, %v909
    %v916 = vsel %vm124, %v892, 0
    %918 = vmatpush.bf16.msra.mxu0 0
    %919 = vmatpush.bf16.msra.mxu0 0
    %920 = vmatpush.bf16.msra.mxu0 0
    %921 = vmatpush.bf16.msra.mxu0 0
    %922 = vmatpush.bf16.msra.mxu0 0
    %923 = vmatpush.bf16.msra.mxu0 0
    %924 = vmatpush.bf16.msra.mxu0 %v912
    %925 = vmatpush.bf16.msra.mxu0 %v911
    %926 = vmatmul.bf16.gmra.mxu0 %v916
    %v927 = vpop.f32.mrf.mxu0
    %v928 = vadd.f32 %v901, %v927
    %v929 = vpop.f32.mrf.mxu0
    %v930 = vadd.f32 %v901, %v929
    %931 = vdwg.mxu0
    %v932 = vpack.c.bf16 %v930, %v928
    %934 = vrot.lane.b32.xlu0 %v932, 96
    %v935 = vpop.permute.xlu0 %934
    %v937 = vsel %vm224, %v932, 0
    %v940 = vsel %vm224, %v935, 0
    %942 = vmatpush.bf16.xpose.msra.mxu0 0
    %943 = vmatpush.bf16.xpose.msra.mxu0 0
    %944 = vmatpush.bf16.xpose.msra.mxu0 0
    %945 = vmatpush.bf16.xpose.msra.mxu0 0
    %946 = vmatpush.bf16.xpose.msra.mxu0 0
    %947 = vmatpush.bf16.xpose.msra.mxu0 0
    %948 = vmatpush.bf16.xpose.msra.mxu0 0
    %949 = vmatpush.bf16.xpose.msra.mxu0 %v940
    %950 = vmatmul.bf16.gmra.mxu0 %v937
    %v951 = vpop.f32.mrf.mxu0
    %v952 = vadd.f32 0.0, %v951
    %v953 = vpop.f32.mrf.mxu0
    %v954 = vadd.f32 0.0, %v953
    %955 = vdwg.mxu0
    %v956 = vmul.f32 %v952, 0.35355338
    %v957 = vmul.f32 %v954, 0.35355338
    %v958 = vadd.f32 %v956, %v118
    %v959 = vadd.f32 %v957, %v119
    %v960 = vsel %vm249, %v958, -inf
    %961 = vmax.xlane.f32.xlu0 %v960
    %v962 = vpop.xlane.xlu0 %961
    %v963 = vsel %vm249, %v959, -inf
    %964 = vmax.xlane.f32.xlu0 %v963
    %v965 = vpop.xlane.xlu0 %964
    %v966 = vsub.f32 %v958, %v962
    %v967 = vsub.f32 %v959, %v965
    %v968 = vmul.f32 %v966, 1.442695
    %v969 = vpow.pop %v968
    %v970 = vmul.f32 %v967, 1.442695
    %v971 = vpow.pop %v970
    %v972 = vsel %vm249, %v969, 0.0
    %973 = vadd.xlane.f32.xlu0 %v972
    %v974 = vpop.xlane.xlu0 %973
    %v975 = vsel %vm249, %v971, 0.0
    %976 = vadd.xlane.f32.xlu0 %v975
    %v977 = vpop.xlane.xlu0 %976
    %v978 = vrcp.pop %v974
    %v979 = vmul.f32 %v974, %v978
    %v980 = vsub.f32 1.0, %v979
    %v981 = vmul.f32 %v978, %v980
    %v982 = vadd.f32 %v978, %v981
    %vm983 = vweird.f32 %v974
    %vm984 = vweird.f32 %v978
    %vm985 = vmor %vm983, %vm984
    %v986 = vsel %vm985, %v978, %v982
    %v987 = vand.u32 2147483647, %v974
    %vm988 = vcmp.eq.f32.partialorder %v987, 8.507059e+37
    %v989 = vand.u32 %v974, 2147483648
    %v990 = vor.u32 1.1754944e-38, %v989
    %v991 = vsel %vm988, %v990, %v986
    %v992 = vmul.f32 %v969, %v991
    %v993 = vrcp.pop %v977
    %v994 = vmul.f32 %v977, %v993
    %v995 = vsub.f32 1.0, %v994
    %v996 = vmul.f32 %v993, %v995
    %v997 = vadd.f32 %v993, %v996
    %vm998 = vweird.f32 %v977
    %vm999 = vweird.f32 %v993
    %vm1000 = vmor %vm998, %vm999
    %v1001 = vsel %vm1000, %v993, %v997
    %v1002 = vand.u32 2147483647, %v977
    %vm1003 = vcmp.eq.f32.partialorder %v1002, 8.507059e+37
    %v1004 = vand.u32 %v977, 2147483648
    %v1005 = vor.u32 1.1754944e-38, %v1004
    %v1006 = vsel %vm1003, %v1005, %v1001
    %v1007 = vmul.f32 %v971, %v1006
    %v1008 = vpack.c.bf16 %v1007, %v992
    %1009 = vrot.lane.b32.xlu0 %v932, 64
    %v1010 = vpop.permute.xlu0 %1009
    %v1013 = vsel %vm249, %v1008, 0
    %1015 = vmatpush.bf16.msra.mxu0 0
    %1016 = vmatpush.bf16.msra.mxu0 0
    %1017 = vmatpush.bf16.msra.mxu0 0
    %1018 = vmatpush.bf16.msra.mxu0 0
    %1019 = vmatpush.bf16.msra.mxu0 0
    %1020 = vmatpush.bf16.msra.mxu0 0
    %1021 = vmatpush.bf16.msra.mxu0 0
    %1022 = vmatpush.bf16.msra.mxu0 %v1010
    %1023 = vmatmul.bf16.gmra.mxu0 %v1013
    %v1024 = vpop.f32.mrf.mxu0
    %v1025 = vadd.f32 0.0, %v1024
    %v1026 = vpop.f32.mrf.mxu0
    %v1027 = vadd.f32 0.0, %v1026
    %1028 = vdwg.mxu0
    %1029 = vrot.lane.b32.xlu0 %v932, 120
    %v1030 = vpop.permute.xlu0 %1029
    %1031 = vrot.lane.b32.xlu0 %v932, 88
    %v1032 = vpop.permute.xlu0 %1031
    %v1034 = vsel %vm224, %v1030, 0
    %v1037 = vsel %vm224, %v1032, 0
    %1039 = vmatpush.bf16.xpose.msra.mxu0 0
    %1040 = vmatpush.bf16.xpose.msra.mxu0 0
    %1041 = vmatpush.bf16.xpose.msra.mxu0 0
    %1042 = vmatpush.bf16.xpose.msra.mxu0 0
    %1043 = vmatpush.bf16.xpose.msra.mxu0 0
    %1044 = vmatpush.bf16.xpose.msra.mxu0 0
    %1045 = vmatpush.bf16.xpose.msra.mxu0 0
    %1046 = vmatpush.bf16.xpose.msra.mxu0 %v1037
    %1047 = vmatmul.bf16.gmra.mxu0 %v1034
    %v1048 = vpop.f32.mrf.mxu0
    %v1049 = vadd.f32 0.0, %v1048
    %v1050 = vpop.f32.mrf.mxu0
    %v1051 = vadd.f32 0.0, %v1050
    %1052 = vdwg.mxu0
    %v1053 = vmul.f32 %v1049, 0.35355338
    %v1054 = vmul.f32 %v1051, 0.35355338
    %v1055 = vadd.f32 %v1053, %v118
    %v1056 = vadd.f32 %v1054, %v119
    %v1057 = vsel %vm249, %v1055, -inf
    %1058 = vmax.xlane.f32.xlu0 %v1057
    %v1059 = vpop.xlane.xlu0 %1058
    %v1060 = vsel %vm249, %v1056, -inf
    %1061 = vmax.xlane.f32.xlu0 %v1060
    %v1062 = vpop.xlane.xlu0 %1061
    %v1063 = vsub.f32 %v1055, %v1059
    %v1064 = vsub.f32 %v1056, %v1062
    %v1065 = vmul.f32 %v1063, 1.442695
    %v1066 = vpow.pop %v1065
    %v1067 = vmul.f32 %v1064, 1.442695
    %v1068 = vpow.pop %v1067
    %v1069 = vsel %vm249, %v1066, 0.0
    %1070 = vadd.xlane.f32.xlu0 %v1069
    %v1071 = vpop.xlane.xlu0 %1070
    %v1072 = vsel %vm249, %v1068, 0.0
    %1073 = vadd.xlane.f32.xlu0 %v1072
    %v1074 = vpop.xlane.xlu0 %1073
    %v1075 = vrcp.pop %v1071
    %v1076 = vmul.f32 %v1071, %v1075
    %v1077 = vsub.f32 1.0, %v1076
    %v1078 = vmul.f32 %v1075, %v1077
    %v1079 = vadd.f32 %v1075, %v1078
    %vm1080 = vweird.f32 %v1071
    %vm1081 = vweird.f32 %v1075
    %vm1082 = vmor %vm1080, %vm1081
    %v1083 = vsel %vm1082, %v1075, %v1079
    %v1084 = vand.u32 2147483647, %v1071
    %vm1085 = vcmp.eq.f32.partialorder %v1084, 8.507059e+37
    %v1086 = vand.u32 %v1071, 2147483648
    %v1087 = vor.u32 1.1754944e-38, %v1086
    %v1088 = vsel %vm1085, %v1087, %v1083
    %v1089 = vmul.f32 %v1066, %v1088
    %v1090 = vrcp.pop %v1074
    %v1091 = vmul.f32 %v1074, %v1090
    %v1092 = vsub.f32 1.0, %v1091
    %v1093 = vmul.f32 %v1090, %v1092
    %v1094 = vadd.f32 %v1090, %v1093
    %vm1095 = vweird.f32 %v1074
    %vm1096 = vweird.f32 %v1090
    %vm1097 = vmor %vm1095, %vm1096
    %v1098 = vsel %vm1097, %v1090, %v1094
    %v1099 = vand.u32 2147483647, %v1074
    %vm1100 = vcmp.eq.f32.partialorder %v1099, 8.507059e+37
    %v1101 = vand.u32 %v1074, 2147483648
    %v1102 = vor.u32 1.1754944e-38, %v1101
    %v1103 = vsel %vm1100, %v1102, %v1098
    %v1104 = vmul.f32 %v1068, %v1103
    %v1105 = vpack.c.bf16 %v1104, %v1089
    %1106 = vrot.lane.b32.xlu0 %v932, 56
    %v1107 = vpop.permute.xlu0 %1106
    %v1110 = vsel %vm249, %v1105, 0
    %1112 = vmatpush.bf16.msra.mxu0 0
    %1113 = vmatpush.bf16.msra.mxu0 0
    %1114 = vmatpush.bf16.msra.mxu0 0
    %1115 = vmatpush.bf16.msra.mxu0 0
    %1116 = vmatpush.bf16.msra.mxu0 0
    %1117 = vmatpush.bf16.msra.mxu0 0
    %1118 = vmatpush.bf16.msra.mxu0 0
    %1119 = vmatpush.bf16.msra.mxu0 %v1107
    %1120 = vmatmul.bf16.gmra.mxu0 %v1110
    %v1121 = vpop.f32.mrf.mxu0
    %v1122 = vadd.f32 0.0, %v1121
    %v1123 = vpop.f32.mrf.mxu0
    %v1124 = vadd.f32 0.0, %v1123
    %1125 = vdwg.mxu0
    %1126 = vrot.lane.b32.xlu0 %v932, 112
    %v1127 = vpop.permute.xlu0 %1126
    %1128 = vrot.lane.b32.xlu0 %v932, 80
    %v1129 = vpop.permute.xlu0 %1128
    %v1131 = vsel %vm224, %v1127, 0
    %v1134 = vsel %vm224, %v1129, 0
    %1136 = vmatpush.bf16.xpose.msra.mxu0 0
    %1137 = vmatpush.bf16.xpose.msra.mxu0 0
    %1138 = vmatpush.bf16.xpose.msra.mxu0 0
    %1139 = vmatpush.bf16.xpose.msra.mxu0 0
    %1140 = vmatpush.bf16.xpose.msra.mxu0 0
    %1141 = vmatpush.bf16.xpose.msra.mxu0 0
    %1142 = vmatpush.bf16.xpose.msra.mxu0 0
    %1143 = vmatpush.bf16.xpose.msra.mxu0 %v1134
    %1144 = vmatmul.bf16.gmra.mxu0 %v1131
    %v1145 = vpop.f32.mrf.mxu0
    %v1146 = vadd.f32 0.0, %v1145
    %v1147 = vpop.f32.mrf.mxu0
    %v1148 = vadd.f32 0.0, %v1147
    %1149 = vdwg.mxu0
    %v1150 = vmul.f32 %v1146, 0.35355338
    %v1151 = vmul.f32 %v1148, 0.35355338
    %v1152 = vadd.f32 %v1150, %v118
    %v1153 = vadd.f32 %v1151, %v119
    %v1154 = vsel %vm249, %v1152, -inf
    %1155 = vmax.xlane.f32.xlu0 %v1154
    %v1156 = vpop.xlane.xlu0 %1155
    %v1157 = vsel %vm249, %v1153, -inf
    %1158 = vmax.xlane.f32.xlu0 %v1157
    %v1159 = vpop.xlane.xlu0 %1158
    %v1160 = vsub.f32 %v1152, %v1156
    %v1161 = vsub.f32 %v1153, %v1159
    %v1162 = vmul.f32 %v1160, 1.442695
    %v1163 = vpow.pop %v1162
    %v1164 = vmul.f32 %v1161, 1.442695
    %v1165 = vpow.pop %v1164
    %v1166 = vsel %vm249, %v1163, 0.0
    %1167 = vadd.xlane.f32.xlu0 %v1166
    %v1168 = vpop.xlane.xlu0 %1167
    %v1169 = vsel %vm249, %v1165, 0.0
    %1170 = vadd.xlane.f32.xlu0 %v1169
    %v1171 = vpop.xlane.xlu0 %1170
    %v1172 = vrcp.pop %v1168
    %v1173 = vmul.f32 %v1168, %v1172
    %v1174 = vsub.f32 1.0, %v1173
    %v1175 = vmul.f32 %v1172, %v1174
    %v1176 = vadd.f32 %v1172, %v1175
    %vm1177 = vweird.f32 %v1168
    %vm1178 = vweird.f32 %v1172
    %vm1179 = vmor %vm1177, %vm1178
    %v1180 = vsel %vm1179, %v1172, %v1176
    %v1181 = vand.u32 2147483647, %v1168
    %vm1182 = vcmp.eq.f32.partialorder %v1181, 8.507059e+37
    %v1183 = vand.u32 %v1168, 2147483648
    %v1184 = vor.u32 1.1754944e-38, %v1183
    %v1185 = vsel %vm1182, %v1184, %v1180
    %v1186 = vmul.f32 %v1163, %v1185
    %v1187 = vrcp.pop %v1171
    %v1188 = vmul.f32 %v1171, %v1187
    %v1189 = vsub.f32 1.0, %v1188
    %v1190 = vmul.f32 %v1187, %v1189
    %v1191 = vadd.f32 %v1187, %v1190
    %vm1192 = vweird.f32 %v1171
    %vm1193 = vweird.f32 %v1187
    %vm1194 = vmor %vm1192, %vm1193
    %v1195 = vsel %vm1194, %v1187, %v1191
    %v1196 = vand.u32 2147483647, %v1171
    %vm1197 = vcmp.eq.f32.partialorder %v1196, 8.507059e+37
    %v1198 = vand.u32 %v1171, 2147483648
    %v1199 = vor.u32 1.1754944e-38, %v1198
    %v1200 = vsel %vm1197, %v1199, %v1195
    %v1201 = vmul.f32 %v1165, %v1200
    %v1202 = vpack.c.bf16 %v1201, %v1186
    %1203 = vrot.lane.b32.xlu0 %v932, 48
    %v1204 = vpop.permute.xlu0 %1203
    %v1207 = vsel %vm249, %v1202, 0
    %1209 = vmatpush.bf16.msra.mxu0 0
    %1210 = vmatpush.bf16.msra.mxu0 0
    %1211 = vmatpush.bf16.msra.mxu0 0
    %1212 = vmatpush.bf16.msra.mxu0 0
    %1213 = vmatpush.bf16.msra.mxu0 0
    %1214 = vmatpush.bf16.msra.mxu0 0
    %1215 = vmatpush.bf16.msra.mxu0 0
    %1216 = vmatpush.bf16.msra.mxu0 %v1204
    %1217 = vmatmul.bf16.gmra.mxu0 %v1207
    %v1218 = vpop.f32.mrf.mxu0
    %v1219 = vadd.f32 0.0, %v1218
    %v1220 = vpop.f32.mrf.mxu0
    %v1221 = vadd.f32 0.0, %v1220
    %1222 = vdwg.mxu0
    %1223 = vrot.lane.b32.xlu0 %v932, 104
    %v1224 = vpop.permute.xlu0 %1223
    %1225 = vrot.lane.b32.xlu0 %v932, 72
    %v1226 = vpop.permute.xlu0 %1225
    %v1228 = vsel %vm224, %v1224, 0
    %v1231 = vsel %vm224, %v1226, 0
    %1233 = vmatpush.bf16.xpose.msra.mxu0 0
    %1234 = vmatpush.bf16.xpose.msra.mxu0 0
    %1235 = vmatpush.bf16.xpose.msra.mxu0 0
    %1236 = vmatpush.bf16.xpose.msra.mxu0 0
    %1237 = vmatpush.bf16.xpose.msra.mxu0 0
    %1238 = vmatpush.bf16.xpose.msra.mxu0 0
    %1239 = vmatpush.bf16.xpose.msra.mxu0 0
    %1240 = vmatpush.bf16.xpose.msra.mxu0 %v1231
    %1241 = vmatmul.bf16.gmra.mxu0 %v1228
    %v1242 = vpop.f32.mrf.mxu0
    %v1243 = vadd.f32 0.0, %v1242
    %v1244 = vpop.f32.mrf.mxu0
    %v1245 = vadd.f32 0.0, %v1244
    %1246 = vdwg.mxu0
    %v1247 = vmul.f32 %v1243, 0.35355338
    %v1248 = vmul.f32 %v1245, 0.35355338
    %v1249 = vadd.f32 %v1247, %v118
    %v1250 = vadd.f32 %v1248, %v119
    %v1251 = vsel %vm249, %v1249, -inf
    %1252 = vmax.xlane.f32.xlu0 %v1251
    %v1253 = vpop.xlane.xlu0 %1252
    %v1254 = vsel %vm249, %v1250, -inf
    %1255 = vmax.xlane.f32.xlu0 %v1254
    %v1256 = vpop.xlane.xlu0 %1255
    %v1257 = vsub.f32 %v1249, %v1253
    %v1258 = vsub.f32 %v1250, %v1256
    %v1259 = vmul.f32 %v1257, 1.442695
    %v1260 = vpow.pop %v1259
    %v1261 = vmul.f32 %v1258, 1.442695
    %v1262 = vpow.pop %v1261
    %v1263 = vsel %vm249, %v1260, 0.0
    %1264 = vadd.xlane.f32.xlu0 %v1263
    %v1265 = vpop.xlane.xlu0 %1264
    %v1266 = vsel %vm249, %v1262, 0.0
    %1267 = vadd.xlane.f32.xlu0 %v1266
    %v1268 = vpop.xlane.xlu0 %1267
    %v1269 = vrcp.pop %v1265
    %v1270 = vmul.f32 %v1265, %v1269
    %v1271 = vsub.f32 1.0, %v1270
    %v1272 = vmul.f32 %v1269, %v1271
    %v1273 = vadd.f32 %v1269, %v1272
    %vm1274 = vweird.f32 %v1265
    %vm1275 = vweird.f32 %v1269
    %vm1276 = vmor %vm1274, %vm1275
    %v1277 = vsel %vm1276, %v1269, %v1273
    %v1278 = vand.u32 2147483647, %v1265
    %vm1279 = vcmp.eq.f32.partialorder %v1278, 8.507059e+37
    %v1280 = vand.u32 %v1265, 2147483648
    %v1281 = vor.u32 1.1754944e-38, %v1280
    %v1282 = vsel %vm1279, %v1281, %v1277
    %v1283 = vmul.f32 %v1260, %v1282
    %v1284 = vrcp.pop %v1268
    %v1285 = vmul.f32 %v1268, %v1284
    %v1286 = vsub.f32 1.0, %v1285
    %v1287 = vmul.f32 %v1284, %v1286
    %v1288 = vadd.f32 %v1284, %v1287
    %vm1289 = vweird.f32 %v1268
    %vm1290 = vweird.f32 %v1284
    %vm1291 = vmor %vm1289, %vm1290
    %v1292 = vsel %vm1291, %v1284, %v1288
    %v1293 = vand.u32 2147483647, %v1268
    %vm1294 = vcmp.eq.f32.partialorder %v1293, 8.507059e+37
    %v1295 = vand.u32 %v1268, 2147483648
    %v1296 = vor.u32 1.1754944e-38, %v1295
    %v1297 = vsel %vm1294, %v1296, %v1292
    %v1298 = vmul.f32 %v1262, %v1297
    %v1299 = vpack.c.bf16 %v1298, %v1283
    %1300 = vrot.lane.b32.xlu0 %v932, 40
    %v1301 = vpop.permute.xlu0 %1300
    %v1304 = vsel %vm249, %v1299, 0
    %1306 = vmatpush.bf16.msra.mxu0 0
    %1307 = vmatpush.bf16.msra.mxu0 0
    %1308 = vmatpush.bf16.msra.mxu0 0
    %1309 = vmatpush.bf16.msra.mxu0 0
    %1310 = vmatpush.bf16.msra.mxu0 0
    %1311 = vmatpush.bf16.msra.mxu0 0
    %1312 = vmatpush.bf16.msra.mxu0 0
    %1313 = vmatpush.bf16.msra.mxu0 %v1301
    %1314 = vmatmul.bf16.gmra.mxu0 %v1304
    %v1315 = vpop.f32.mrf.mxu0
    %v1316 = vadd.f32 0.0, %v1315
    %v1317 = vpop.f32.mrf.mxu0
    %v1318 = vadd.f32 0.0, %v1317
    %1319 = vdwg.mxu0
    %1322 = vrot.lane.b32.xlu0 %v1122, 8
    %v1323 = vpop.permute.xlu0 %1322
    %1324 = vrot.lane.b32.xlu0 %v1124, 8
    %v1325 = vpop.permute.xlu0 %1324
    %1330 = vrot.lane.b32.xlu0 %v1219, 16
    %v1331 = vpop.permute.xlu0 %1330
    %1332 = vrot.lane.b32.xlu0 %v1221, 16
    %v1333 = vpop.permute.xlu0 %1332
    %1338 = vrot.lane.b32.xlu0 %v1316, 24
    %v1339 = vpop.permute.xlu0 %1338
    %1340 = vrot.lane.b32.xlu0 %v1318, 24
    %v1341 = vpop.permute.xlu0 %1340
    %v1344 = vsel %vm224, %v1025, %v1323
    %v1345 = vsel %vm224, %v1027, %v1325
    %v1346 = vsel %vm249, %v1344, %v1331
    %v1347 = vsel %vm249, %v1345, %v1333
    %v1348 = vsel %vm638, %v1346, %v1339
    %v1349 = vsel %vm638, %v1347, %v1341
    %v1350 = vpack.c.bf16 %v1349, %v1348
    %s1351 = scalar_lea.vmem %s4, 16
    %v1352 = vld [vmem:[%s1351] sm:$0xf]
    %v1353 = vld [vmem:[%s1351 + $0x4] sm:$0xf]
    %v1354 = vld [vmem:[%s1351 + $0x8] sm:$0xf]
    %v1355 = vld [vmem:[%s1351 + $0xc] sm:$0xf]
    %v1356 = vperm.slane %v841, 0
    %v1361 = vunpack.c.l.b16 %v1352
    %v1362 = vunpack.c.l.b16 %v1353
    %v1363 = vunpack.c.l.b16 %v1354
    %v1364 = vunpack.c.l.b16 %v1355
    %v1365 = vpack.c.b16 %v1362, %v1361
    %v1366 = vpack.c.b16 %v1364, %v1363
    %v1370 = vsel %vm124, %v1350, 0
    %1372 = vmatpush.bf16.msra.mxu0 0
    %1373 = vmatpush.bf16.msra.mxu0 0
    %1374 = vmatpush.bf16.msra.mxu0 0
    %1375 = vmatpush.bf16.msra.mxu0 0
    %1376 = vmatpush.bf16.msra.mxu0 0
    %1377 = vmatpush.bf16.msra.mxu0 0
    %1378 = vmatpush.bf16.msra.mxu0 %v1366
    %1379 = vmatpush.bf16.msra.mxu0 %v1365
    %1380 = vmatmul.bf16.gmra.mxu0 %v1370
    %v1381 = vpop.f32.mrf.mxu0
    %v1382 = vadd.f32 %v1356, %v1381
    %v1383 = vpop.f32.mrf.mxu0
    %v1384 = vadd.f32 %v1356, %v1383
    %1385 = vdwg.mxu0
    %v1386 = vadd.f32 %v836, %v1382
    %v1387 = vadd.f32 %v837, %v1384
    %v1388 = vsel %vm124, %v1386, 0.0
    %1389 = vadd.xlane.f32.xlu0 %v1388
    %v1390 = vpop.xlane.xlu0 %1389
    %v1391 = vsel %vm124, %v1387, 0.0
    %1392 = vadd.xlane.f32.xlu0 %v1391
    %v1393 = vpop.xlane.xlu0 %1392
    %v1394 = vmul.f32 %v1390, %v137
    %v1395 = vmul.f32 %v1393, %v137
    %v1396 = vsub.f32 %v1386, %v1394
    %v1397 = vsub.f32 %v1387, %v1395
    %v1398 = vmul.f32 %v1396, %v1396
    %v1399 = vmul.f32 %v1397, %v1397
    %v1400 = vsel %vm124, %v1398, 0.0
    %1401 = vadd.xlane.f32.xlu0 %v1400
    %v1402 = vpop.xlane.xlu0 %1401
    %v1403 = vsel %vm124, %v1399, 0.0
    %1404 = vadd.xlane.f32.xlu0 %v1403
    %v1405 = vpop.xlane.xlu0 %1404
    %v1406 = vmul.f32 %v1402, %v137
    %v1407 = vmul.f32 %v1405, %v137
    %v1408 = vadd.f32 %v1406, 1e-05
    %v1409 = vadd.f32 %v1407, 1e-05
    %v1410 = vrsqrt.pop %v1408
    %v1411 = vmul.f32 %v1410, %v1408
    %v1412 = vmul.f32 %v1411, %v1410
    %v1413 = vmul.f32 0.5, %v1412
    %v1414 = vsub.f32 1.5, %v1413
    %v1415 = vmul.f32 %v1410, %v1414
    %vm1416 = vweird.f32 %v1408
    %vm1417 = vweird.f32 %v1410
    %vm1418 = vmor %vm1416, %vm1417
    %v1419 = vsel %vm1418, %v1410, %v1415
    %v1420 = vrsqrt.pop %v1409
    %v1421 = vmul.f32 %v1420, %v1409
    %v1422 = vmul.f32 %v1421, %v1420
    %v1423 = vmul.f32 0.5, %v1422
    %v1424 = vsub.f32 1.5, %v1423
    %v1425 = vmul.f32 %v1420, %v1424
    %vm1426 = vweird.f32 %v1409
    %vm1427 = vweird.f32 %v1420
    %vm1428 = vmor %vm1426, %vm1427
    %v1429 = vsel %vm1428, %v1420, %v1425
    %v1430 = vmul.f32 %v1396, %v1419
    %v1431 = vmul.f32 %v1397, %v1429
    %v1432 = vperm.slane %v839, 2
    %v1433 = vmul.f32 %v1430, %v1432
    %v1434 = vmul.f32 %v1431, %v1432
    %v1435 = vperm.slane %v839, 3
    %v1436 = vadd.f32 %v1433, %v1435
    %v1437 = vadd.f32 %v1434, %v1435
    %v1438 = vpack.c.bf16 %v1437, %v1436
    %s1439 = scalar_lea.vmem %s5, 16
    %v1440 = vld [vmem:[%s1439] sm:$0xf]
    %v1441 = vld [vmem:[%s1439 + $0x4] sm:$0xf]
    %v1442 = vld [vmem:[%s1439 + $0x8] sm:$0xf]
    %v1443 = vld [vmem:[%s1439 + $0xc] sm:$0xf]
    %s1444 = scalar_lea.vmem [#allocation8], 1
    %v1445 = vld [vmem:[%s1444] sm:$0x1]
    %v1447 = vperm.slane %v1445, 0
    %v1453 = vunpack.c.l.b16 %v1440
    %v1454 = vunpack.c.l.b16 %v1441
    %v1455 = vunpack.c.l.b16 %v1442
    %v1456 = vunpack.c.l.b16 %v1443
    %v1457 = vpack.c.b16 %v1454, %v1453
    %v1458 = vpack.c.b16 %v1456, %v1455
    %v1462 = vsel %vm124, %v1438, 0
    %1464 = vmatpush.bf16.msra.mxu0 0
    %1465 = vmatpush.bf16.msra.mxu0 0
    %1466 = vmatpush.bf16.msra.mxu0 0
    %1467 = vmatpush.bf16.msra.mxu0 0
    %1468 = vmatpush.bf16.msra.mxu0 0
    %1469 = vmatpush.bf16.msra.mxu0 0
    %1470 = vmatpush.bf16.msra.mxu0 %v1458
    %1471 = vmatpush.bf16.msra.mxu0 %v1457
    %1472 = vmatmul.bf16.gmra.mxu0 %v1462
    %v1473 = vpop.f32.mrf.mxu0
    %v1474 = vadd.f32 %v1447, %v1473
    %v1475 = vpop.f32.mrf.mxu0
    %v1476 = vadd.f32 %v1447, %v1475
    %1477 = vdwg.mxu0
    %v1478 = vmul.f32 %v1474, %v1474
    %v1479 = vmul.f32 %v1476, %v1476
    %v1480 = vmul.f32 %v1474, %v1478
    %v1481 = vmul.f32 %v1476, %v1479
    %v1482 = vmul.f32 %v1480, 0.044715
    %v1483 = vmul.f32 %v1481, 0.044715
    %v1484 = vadd.f32 %v1474, %v1482
    %v1485 = vadd.f32 %v1476, %v1483
    %v1486 = vmul.f32 %v1484, 0.7978846
    %v1487 = vmul.f32 %v1485, 0.7978846
    %v1488 = vtanh.pop %v1486
    %v1489 = vtanh.pop %v1487
    %v1490 = vadd.f32 %v1488, 1.0
    %v1491 = vadd.f32 %v1489, 1.0
    %v1492 = vmul.f32 %v1490, 0.5
    %v1493 = vmul.f32 %v1491, 0.5
    %v1494 = vmul.f32 %v1474, %v1492
    %v1495 = vmul.f32 %v1476, %v1493
    %v1496 = vpack.c.bf16 %v1495, %v1494
    %s1497 = scalar_lea.vmem %s7, 32
    %v1498 = vld [vmem:[%s1497] sm:$0xf]
    %v1499 = vld [vmem:[%s1497 + $0x4] sm:$0xf]
    %v1500 = vld [vmem:[%s1497 + $0x8] sm:$0xf]
    %v1501 = vld [vmem:[%s1497 + $0xc] sm:$0xf]
    %v1502 = vld [vmem:[%s1497 + $0x10] sm:$0xf]
    %v1503 = vld [vmem:[%s1497 + $0x14] sm:$0xf]
    %v1504 = vld [vmem:[%s1497 + $0x18] sm:$0xf]
    %v1505 = vld [vmem:[%s1497 + $0x1c] sm:$0xf]
    %v1506 = vperm.slane %v841, 1
    %v1515 = vunpack.c.l.b16 %v1498
    %v1516 = vunpack.c.l.b16 %v1499
    %v1517 = vunpack.c.l.b16 %v1500
    %v1518 = vunpack.c.l.b16 %v1501
    %v1519 = vunpack.c.l.b16 %v1502
    %v1520 = vunpack.c.l.b16 %v1503
    %v1521 = vunpack.c.l.b16 %v1504
    %v1522 = vunpack.c.l.b16 %v1505
    %v1523 = vpack.c.b16 %v1516, %v1515
    %v1524 = vpack.c.b16 %v1518, %v1517
    %v1525 = vpack.c.b16 %v1520, %v1519
    %v1526 = vpack.c.b16 %v1522, %v1521
    %v1532 = vsel %vm818, %v1496, 0
    %1534 = vmatpush.bf16.msra.mxu0 0
    %1535 = vmatpush.bf16.msra.mxu0 0
    %1536 = vmatpush.bf16.msra.mxu0 0
    %1537 = vmatpush.bf16.msra.mxu0 0
    %1538 = vmatpush.bf16.msra.mxu0 %v1526
    %1539 = vmatpush.bf16.msra.mxu0 %v1525
    %1540 = vmatpush.bf16.msra.mxu0 %v1524
    %1541 = vmatpush.bf16.msra.mxu0 %v1523
    %1542 = vmatmul.bf16.gmra.mxu0 %v1532
    %v1543 = vpop.f32.mrf.mxu0
    %v1544 = vadd.f32 %v1506, %v1543
    %v1545 = vpop.f32.mrf.mxu0
    %v1546 = vadd.f32 %v1506, %v1545
    %1547 = vdwg.mxu0
    %v1548 = vadd.f32 %v1386, %v1544
    %v1549 = vadd.f32 %v1387, %v1546
    %v1550 = vld [vmem:[%s10] sm:$0x1]
    %v1551 = vld [vmem:[%s10 + $0x1] sm:$0x1]
    %v1552 = vsel %vm124, %v1548, 0.0
    %1553 = vadd.xlane.f32.xlu0 %v1552
    %v1554 = vpop.xlane.xlu0 %1553
    %v1555 = vsel %vm124, %v1549, 0.0
    %1556 = vadd.xlane.f32.xlu0 %v1555
    %v1557 = vpop.xlane.xlu0 %1556
    %v1558 = vmul.f32 %v1554, %v137
    %v1559 = vmul.f32 %v1557, %v137
    %v1560 = vsub.f32 %v1548, %v1558
    %v1561 = vsub.f32 %v1549, %v1559
    %v1562 = vmul.f32 %v1560, %v1560
    %v1563 = vmul.f32 %v1561, %v1561
    %v1564 = vsel %vm124, %v1562, 0.0
    %1565 = vadd.xlane.f32.xlu0 %v1564
    %v1566 = vpop.xlane.xlu0 %1565
    %v1567 = vsel %vm124, %v1563, 0.0
    %1568 = vadd.xlane.f32.xlu0 %v1567
    %v1569 = vpop.xlane.xlu0 %1568
    %v1570 = vmul.f32 %v1566, %v137
    %v1571 = vmul.f32 %v1569, %v137
    %v1572 = vadd.f32 %v1570, 1e-05
    %v1573 = vadd.f32 %v1571, 1e-05
    %v1574 = vrsqrt.pop %v1572
    %v1575 = vmul.f32 %v1574, %v1572
    %v1576 = vmul.f32 %v1575, %v1574
    %v1577 = vmul.f32 0.5, %v1576
    %v1578 = vsub.f32 1.5, %v1577
    %v1579 = vmul.f32 %v1574, %v1578
    %vm1580 = vweird.f32 %v1572
    %vm1581 = vweird.f32 %v1574
    %vm1582 = vmor %vm1580, %vm1581
    %v1583 = vsel %vm1582, %v1574, %v1579
    %v1584 = vrsqrt.pop %v1573
    %v1585 = vmul.f32 %v1584, %v1573
    %v1586 = vmul.f32 %v1585, %v1584
    %v1587 = vmul.f32 0.5, %v1586
    %v1588 = vsub.f32 1.5, %v1587
    %v1589 = vmul.f32 %v1584, %v1588
    %vm1590 = vweird.f32 %v1573
    %vm1591 = vweird.f32 %v1584
    %vm1592 = vmor %vm1590, %vm1591
    %v1593 = vsel %vm1592, %v1584, %v1589
    %v1594 = vmul.f32 %v1560, %v1583
    %v1595 = vmul.f32 %v1561, %v1593
    %v1596 = vperm.slane %v1550, 0
    %v1597 = vmul.f32 %v1594, %v1596
    %v1598 = vmul.f32 %v1595, %v1596
    %v1599 = vperm.slane %v1551, 0
    %v1600 = vadd.f32 %v1597, %v1599
    %v1601 = vadd.f32 %v1598, %v1599
    %1602 = vst.msk [vmem:[#allocation11] sm:$0xff] %vm124, %v1600
    %1603 = vst.msk [vmem:[#allocation11 + $0x8] sm:$0xff] %vm124, %v1601
    // Predicated region
    $region66: #{tpu_custom_call.1} parent=1 // pred_check
      _
    $region67: #{tpu_custom_call.1} parent=1 // pred_check_branch
      %1605 = sbr.rel (0) target = $region69
    $region68: #{tpu_custom_call.1} parent=1 // pred_region
      %1607 = vsyncadd [#allocation4], 0
      %s1608 = sshll.u32 [#allocation11], 4
      %s1609 = int_to_ptr.vmem [resolvable:$true] %s1608
      %s1610 = sshll.u32 %s11, 4
      %s1611 = int_to_ptr.hbm [resolvable:$true] %s1610
      %1616 = dma.vmem_to_hbm [thread:$0]  %s1609, 256, %s1611, [#allocation4], 128, 128, 8
    $region69: #{tpu_custom_call.1} parent=1 // pred_fallthru
      _
    // Predicated region
    $region70: #{tpu_custom_call.1} parent=1 // pred_check
      _
    $region71: #{tpu_custom_call.1} parent=1 // pred_check_branch
      %1618 = sbr.rel (0) target = $region73
    $region72: #{tpu_custom_call.1} parent=1 // pred_region
      %1620 = dma.done [#allocation4], 256
    $region73: #{tpu_custom_call.1} parent=1 // pred_fallthru
      _
    %1621 = vsyncpa [#allocation3], 1
    %1622 = vsyncpa [#allocation6], 1
    %1623 = vsyncpa [#allocation9], 1
    %1624 = vsyncpa [#allocation4], 1

</llo_original>
